<compile_context>
chip_gen: v7x
topology: tpu7x:2x2x1
jax: 0.10.0
libtpu: 0.0.40
codegen_flags: <defaults>
</compile_context>

<pallas_src>
import functools

import jax
import jax.numpy as jnp
from jax.experimental import pallas as pl
from jax.experimental.pallas import tpu as pltpu


def _round_up(a, b):
    return (a + b - 1) // b * b


def _conv_block_kernel(x_ref, w_ref, b_ref, o_ref, *, K, Wp, M_img, neg_slope):
    # x_ref: (1, Cin, Lp)      spatially padded input, H/W flattened (compute dtype)
    # w_ref: (K*K, TCO, Cin)   per-tap weights, resident across the grid (compute dtype)
    # b_ref: (TCO, 1)          bias (f32, zero-padded to the sublane granule)
    # o_ref: (1, TCO, M_img)   output tile, lane-dense in M = Ho*Wp
    tco = o_ref.shape[1]
    acc = jnp.zeros((tco, M_img), jnp.float32)
    # Shift-and-matmul: every conv tap (ky, kx) is the contiguous lane-window
    # [ky*Wp + kx, ky*Wp + kx + M_img) of the flattened padded input.  K*K
    # small MXU dots accumulate into an f32 value (no VMEM scratch needed).
    for tap in range(K * K):
        ky, kx = divmod(tap, K)
        off = ky * Wp + kx
        xwin = x_ref[0, :, off:off + M_img]                 # (Cin, M_img)
        acc = acc + jnp.dot(w_ref[tap], xwin,
                            preferred_element_type=jnp.float32)
    out = acc + b_ref[...]                                  # (TCO, M) + (TCO, 1)
    out = jnp.where(out > 0, out, neg_slope * out)          # LeakyReLU
    o_ref[0] = out.astype(o_ref.dtype)


def conv_block_forward(x_nchw, weight, bias, *, kernel_size, stride=1,
                       neg_slope=0.01, compute_dtype=jnp.bfloat16):
    """ConvBlock forward: Conv2d(padding=kernel_size//2, stride) + LeakyReLU.

    x_nchw: (N, Cin, H, W); weight: (Cout, Cin, K, K); bias: (Cout,)
    Returns (N, Cout, Ho, Wo) in NCHW with x_nchw.dtype.

    Note: compute_dtype=bfloat16 (default) uses the MXU's native bf16 path with
    f32 accumulation; pass jnp.float32 to match the PyTorch f32 Conv2d closely.
    """
    N, Cin, H, W = x_nchw.shape
    Cout = weight.shape[0]
    K = kernel_size
    pad = K // 2
    Hp, Wp = H + 2 * pad, W + 2 * pad
    # The kernel computes the stride-1 "same" convolution; stride > 1 is an
    # exact subsampling of that output (applied at the end of the wrapper).
    Ho = Hp - K + 1
    Wo = Wp - K + 1
    M_img = Ho * Wp              # per-image output rows incl. 2*pad garbage cols/row
    Lp = Hp * Wp + (K - 1)       # K-1 trailing zeros keep the last tap window in-bounds

    # -------- layout plumbing (channel-major layout is never transposed) -----
    xc = x_nchw.astype(compute_dtype)        # early cast: halves wrapper HBM traffic
    wc = weight.astype(compute_dtype)
    x_flat = jnp.pad(xc, ((0, 0), (0, 0), (pad, pad), (pad, pad)))
    x_flat = x_flat.reshape(N, Cin, Hp * Wp)
    x_flat = jnp.pad(x_flat, ((0, 0), (0, 0), (0, K - 1)))

    # Cout only needs the 8-sublane granule; no 128-lane padding of the output.
    Cout_p8 = _round_up(Cout, 8)
    if Cout_p8 <= 128:
        TCO, Cout_pad = Cout_p8, Cout_p8
    else:
        TCO, Cout_pad = 128, _round_up(Cout_p8, 128)

    # (Cout,Cin,K,K) -> (K*K, Cout_pad, Cin): tap-major, matching the kernel loop.
    w_taps = jnp.transpose(wc, (2, 3, 0, 1)).reshape(K * K, Cout, Cin)
    w_taps = jnp.pad(w_taps, ((0, 0), (0, Cout_pad - Cout), (0, 0)))
    b2d = jnp.pad(bias.astype(jnp.float32).reshape(Cout, 1),
                  ((0, Cout_pad - Cout), (0, 0)))

    grid = (N, Cout_pad // TCO)
    kernel = functools.partial(_conv_block_kernel, K=K, Wp=Wp, M_img=M_img,
                               neg_slope=neg_slope)

    # Right-sized VMEM request: double-buffered in/out blocks + resident
    # weights/bias + f32 accumulator & epilogue temps, with 2x headroom,
    # clamped to [16 MiB, 32 MiB] (well under v7x's 64 MiB physical VMEM).
    csz = jnp.dtype(compute_dtype).itemsize
    osz = jnp.dtype(x_nchw.dtype).itemsize
    est = (2 * max(Cin, 8) * _round_up(Lp, 128) * csz
           + K * K * Cout_pad * max(Cin, 8) * csz
           + Cout_pad * 4
           + 2 * TCO * _round_up(M_img, 128) * osz
           + 4 * TCO * _round_up(M_img, 128) * 4)
    vmem_limit = int(min(max(2 * est, 16 * 1024 * 1024), 32 * 1024 * 1024))

    # TODO(synk): very large spatial extents (per-image Cin*Hp*Wp slab or
    # Cout*Ho*Wp accumulator beyond a few MiB) would need an extra output-row
    # grid axis with a manual halo DMA; not needed for this module's shapes.
    out_flat = pl.pallas_call(
        kernel,
        out_shape=jax.ShapeDtypeStruct((N, Cout_pad, M_img), x_nchw.dtype),
        grid_spec=pltpu.PrefetchScalarGridSpec(
            num_scalar_prefetch=0,
            grid=grid,
            in_specs=[
                pl.BlockSpec((1, Cin, Lp), lambda n, j: (n, 0, 0)),
                pl.BlockSpec((K * K, TCO, Cin), lambda n, j: (0, j, 0)),
                pl.BlockSpec((TCO, 1), lambda n, j: (j, 0)),
            ],
            out_specs=pl.BlockSpec((1, TCO, M_img), lambda n, j: (n, j, 0)),
        ),
        compiler_params=pltpu.CompilerParams(
            dimension_semantics=("parallel", "parallel"),
            vmem_limit_bytes=vmem_limit,
        ),
    )(x_flat, w_taps, b2d)

    # Drop Cout padding, un-flatten rows, drop the per-row garbage columns.
    out = out_flat[:, :Cout, :].reshape(N, Cout, Ho, Wp)[:, :, :, :Wo]
    if stride != 1:
        # Exact: strided conv == stride-1 conv subsampled at the stride.
        out = out[:, :, ::stride, ::stride]
    return out


def _reference(x_nchw, weight, bias, *, kernel_size, stride=1, neg_slope=0.01):
    pad = kernel_size // 2
    out = jax.lax.conv_general_dilated(
        x_nchw, weight,
        window_strides=(stride, stride),
        padding=((pad, pad), (pad, pad)),
        dimension_numbers=("NCHW", "OIHW", "NCHW"),
    ) + bias.reshape(1, -1, 1, 1)
    return jnp.where(out > 0, out, neg_slope * out)


if __name__ == "__main__":
    key = jax.random.PRNGKey(0)
    k_x, k_w, k_b = jax.random.split(key, 3)

    # Small shapes consistent with the module: batch=2, in_ch=4, out_ch=8,
    # spatial=16, kernel_size=3, stride=1.
    N, Cin, H, W = 2, 4, 16, 16
    Cout, K = 8, 3

    x = jax.random.normal(k_x, (N, Cin, H, W), dtype=jnp.float32)
    weight = jax.random.normal(k_w, (Cout, Cin, K, K), dtype=jnp.float32) * 0.1
    bias = jax.random.normal(k_b, (Cout,), dtype=jnp.float32) * 0.1

    ref = _reference(x, weight, bias, kernel_size=K, stride=1)

    # Exact-math path (f32 compute): tight tolerance.
    out_f32 = jax.block_until_ready(
        conv_block_forward(x, weight, bias, kernel_size=K, stride=1,
                           compute_dtype=jnp.float32))
    assert out_f32.shape == (N, Cout, H, W), out_f32.shape
    assert jnp.allclose(out_f32, ref, atol=1e-3, rtol=1e-3), (
        float(jnp.max(jnp.abs(out_f32 - ref))))

    # Default fast path (bf16 on the MXU, f32 accumulation).
    out_bf16 = jax.block_until_ready(
        conv_block_forward(x, weight, bias, kernel_size=K, stride=1))
    assert out_bf16.shape == (N, Cout, H, W), out_bf16.shape
    assert jnp.allclose(out_bf16, ref, atol=3e-2, rtol=3e-2), (
        float(jnp.max(jnp.abs(out_bf16 - ref))))

    print("KERNEL_OK")
</pallas_src>

<mosaic_0001>
module attributes {stable_mosaic.version = 11 : i64} {
  func.func @_conv_block_kernel(%arg0: i32, %arg1: i32, %arg2: memref<1x4x326xf32, #tpu.memory_space<vmem>>, %arg3: memref<9x8x4xf32, #tpu.memory_space<vmem>>, %arg4: memref<8x1xf32, #tpu.memory_space<vmem>>, %arg5: memref<1x8x288xf32, #tpu.memory_space<vmem>>) attributes {dimension_semantics = [#tpu.dimension_semantics<parallel>, #tpu.dimension_semantics<parallel>], iteration_bounds = array<i64: 2, 1>, scalar_prefetch = 0 : i64, scratch_operands = 0 : i64, tpu.core_type = #tpu.core_type<tc>, window_params = [{transform_indices = @transform_0, window_bounds = array<i64: 1, 4, 326>}, {transform_indices = @transform_1, window_bounds = array<i64: 9, 8, 4>}, {transform_indices = @transform_2, window_bounds = array<i64: 8, 1>}, {transform_indices = @transform_3, window_bounds = array<i64: 1, 8, 288>}]} {
    %cst = arith.constant 0.000000e+00 : f32
    %0 = vector.broadcast %cst : f32 to vector<8x288xf32>
    %c0 = arith.constant 0 : index
    %c0_0 = arith.constant 0 : index
    %c0_1 = arith.constant 0 : index
    %1 = vector.load %arg2[%c0, %c0_0, %c0_1] : memref<1x4x326xf32, #tpu.memory_space<vmem>>, vector<1x4x288xf32>
    %2 = vector.shape_cast %1 : vector<1x4x288xf32> to vector<4x288xf32>
    %c0_2 = arith.constant 0 : index
    %c0_3 = arith.constant 0 : index
    %c0_4 = arith.constant 0 : index
    %3 = vector.load %arg3[%c0_2, %c0_3, %c0_4] : memref<9x8x4xf32, #tpu.memory_space<vmem>>, vector<1x8x4xf32>
    %4 = vector.shape_cast %3 : vector<1x8x4xf32> to vector<8x4xf32>
    %cst_5 = arith.constant dense<0.000000e+00> : vector<8x288xf32>
    %5 = tpu.matmul %4, %2, %cst_5 {dimension_numbers = #tpu.dot_dimension_numbers<[1], [0], [0], [1], [0, 0, 1, 1], [], []>} : vector<8x4xf32>, vector<4x288xf32>, vector<8x288xf32> -> vector<8x288xf32>
    %6 = arith.addf %0, %5 : vector<8x288xf32>
    %c0_6 = arith.constant 0 : index
    %c0_7 = arith.constant 0 : index
    %c1 = arith.constant 1 : index
    %7 = vector.load %arg2[%c0_6, %c0_7, %c1] : memref<1x4x326xf32, #tpu.memory_space<vmem>>, vector<1x4x288xf32>
    %8 = vector.shape_cast %7 : vector<1x4x288xf32> to vector<4x288xf32>
    %c1_8 = arith.constant 1 : index
    %c0_9 = arith.constant 0 : index
    %c0_10 = arith.constant 0 : index
    %9 = vector.load %arg3[%c1_8, %c0_9, %c0_10] : memref<9x8x4xf32, #tpu.memory_space<vmem>>, vector<1x8x4xf32>
    %10 = vector.shape_cast %9 : vector<1x8x4xf32> to vector<8x4xf32>
    %cst_11 = arith.constant dense<0.000000e+00> : vector<8x288xf32>
    %11 = tpu.matmul %10, %8, %cst_11 {dimension_numbers = #tpu.dot_dimension_numbers<[1], [0], [0], [1], [0, 0, 1, 1], [], []>} : vector<8x4xf32>, vector<4x288xf32>, vector<8x288xf32> -> vector<8x288xf32>
    %12 = arith.addf %6, %11 : vector<8x288xf32>
    %c0_12 = arith.constant 0 : index
    %c0_13 = arith.constant 0 : index
    %c2 = arith.constant 2 : index
    %13 = vector.load %arg2[%c0_12, %c0_13, %c2] : memref<1x4x326xf32, #tpu.memory_space<vmem>>, vector<1x4x288xf32>
    %14 = vector.shape_cast %13 : vector<1x4x288xf32> to vector<4x288xf32>
    %c2_14 = arith.constant 2 : index
    %c0_15 = arith.constant 0 : index
    %c0_16 = arith.constant 0 : index
    %15 = vector.load %arg3[%c2_14, %c0_15, %c0_16] : memref<9x8x4xf32, #tpu.memory_space<vmem>>, vector<1x8x4xf32>
    %16 = vector.shape_cast %15 : vector<1x8x4xf32> to vector<8x4xf32>
    %cst_17 = arith.constant dense<0.000000e+00> : vector<8x288xf32>
    %17 = tpu.matmul %16, %14, %cst_17 {dimension_numbers = #tpu.dot_dimension_numbers<[1], [0], [0], [1], [0, 0, 1, 1], [], []>} : vector<8x4xf32>, vector<4x288xf32>, vector<8x288xf32> -> vector<8x288xf32>
    %18 = arith.addf %12, %17 : vector<8x288xf32>
    %c0_18 = arith.constant 0 : index
    %c0_19 = arith.constant 0 : index
    %c18 = arith.constant 18 : index
    %19 = vector.load %arg2[%c0_18, %c0_19, %c18] : memref<1x4x326xf32, #tpu.memory_space<vmem>>, vector<1x4x288xf32>
    %20 = vector.shape_cast %19 : vector<1x4x288xf32> to vector<4x288xf32>
    %c3 = arith.constant 3 : index
    %c0_20 = arith.constant 0 : index
    %c0_21 = arith.constant 0 : index
    %21 = vector.load %arg3[%c3, %c0_20, %c0_21] : memref<9x8x4xf32, #tpu.memory_space<vmem>>, vector<1x8x4xf32>
    %22 = vector.shape_cast %21 : vector<1x8x4xf32> to vector<8x4xf32>
    %cst_22 = arith.constant dense<0.000000e+00> : vector<8x288xf32>
    %23 = tpu.matmul %22, %20, %cst_22 {dimension_numbers = #tpu.dot_dimension_numbers<[1], [0], [0], [1], [0, 0, 1, 1], [], []>} : vector<8x4xf32>, vector<4x288xf32>, vector<8x288xf32> -> vector<8x288xf32>
    %24 = arith.addf %18, %23 : vector<8x288xf32>
    %c0_23 = arith.constant 0 : index
    %c0_24 = arith.constant 0 : index
    %c19 = arith.constant 19 : index
    %25 = vector.load %arg2[%c0_23, %c0_24, %c19] : memref<1x4x326xf32, #tpu.memory_space<vmem>>, vector<1x4x288xf32>
    %26 = vector.shape_cast %25 : vector<1x4x288xf32> to vector<4x288xf32>
    %c4 = arith.constant 4 : index
    %c0_25 = arith.constant 0 : index
    %c0_26 = arith.constant 0 : index
    %27 = vector.load %arg3[%c4, %c0_25, %c0_26] : memref<9x8x4xf32, #tpu.memory_space<vmem>>, vector<1x8x4xf32>
    %28 = vector.shape_cast %27 : vector<1x8x4xf32> to vector<8x4xf32>
    %cst_27 = arith.constant dense<0.000000e+00> : vector<8x288xf32>
    %29 = tpu.matmul %28, %26, %cst_27 {dimension_numbers = #tpu.dot_dimension_numbers<[1], [0], [0], [1], [0, 0, 1, 1], [], []>} : vector<8x4xf32>, vector<4x288xf32>, vector<8x288xf32> -> vector<8x288xf32>
    %30 = arith.addf %24, %29 : vector<8x288xf32>
    %c0_28 = arith.constant 0 : index
    %c0_29 = arith.constant 0 : index
    %c20 = arith.constant 20 : index
    %31 = vector.load %arg2[%c0_28, %c0_29, %c20] : memref<1x4x326xf32, #tpu.memory_space<vmem>>, vector<1x4x288xf32>
    %32 = vector.shape_cast %31 : vector<1x4x288xf32> to vector<4x288xf32>
    %c5 = arith.constant 5 : index
    %c0_30 = arith.constant 0 : index
    %c0_31 = arith.constant 0 : index
    %33 = vector.load %arg3[%c5, %c0_30, %c0_31] : memref<9x8x4xf32, #tpu.memory_space<vmem>>, vector<1x8x4xf32>
    %34 = vector.shape_cast %33 : vector<1x8x4xf32> to vector<8x4xf32>
    %cst_32 = arith.constant dense<0.000000e+00> : vector<8x288xf32>
    %35 = tpu.matmul %34, %32, %cst_32 {dimension_numbers = #tpu.dot_dimension_numbers<[1], [0], [0], [1], [0, 0, 1, 1], [], []>} : vector<8x4xf32>, vector<4x288xf32>, vector<8x288xf32> -> vector<8x288xf32>
    %36 = arith.addf %30, %35 : vector<8x288xf32>
    %c0_33 = arith.constant 0 : index
    %c0_34 = arith.constant 0 : index
    %c36 = arith.constant 36 : index
    %37 = vector.load %arg2[%c0_33, %c0_34, %c36] : memref<1x4x326xf32, #tpu.memory_space<vmem>>, vector<1x4x288xf32>
    %38 = vector.shape_cast %37 : vector<1x4x288xf32> to vector<4x288xf32>
    %c6 = arith.constant 6 : index
    %c0_35 = arith.constant 0 : index
    %c0_36 = arith.constant 0 : index
    %39 = vector.load %arg3[%c6, %c0_35, %c0_36] : memref<9x8x4xf32, #tpu.memory_space<vmem>>, vector<1x8x4xf32>
    %40 = vector.shape_cast %39 : vector<1x8x4xf32> to vector<8x4xf32>
    %cst_37 = arith.constant dense<0.000000e+00> : vector<8x288xf32>
    %41 = tpu.matmul %40, %38, %cst_37 {dimension_numbers = #tpu.dot_dimension_numbers<[1], [0], [0], [1], [0, 0, 1, 1], [], []>} : vector<8x4xf32>, vector<4x288xf32>, vector<8x288xf32> -> vector<8x288xf32>
    %42 = arith.addf %36, %41 : vector<8x288xf32>
    %c0_38 = arith.constant 0 : index
    %c0_39 = arith.constant 0 : index
    %c37 = arith.constant 37 : index
    %43 = vector.load %arg2[%c0_38, %c0_39, %c37] : memref<1x4x326xf32, #tpu.memory_space<vmem>>, vector<1x4x288xf32>
    %44 = vector.shape_cast %43 : vector<1x4x288xf32> to vector<4x288xf32>
    %c7 = arith.constant 7 : index
    %c0_40 = arith.constant 0 : index
    %c0_41 = arith.constant 0 : index
    %45 = vector.load %arg3[%c7, %c0_40, %c0_41] : memref<9x8x4xf32, #tpu.memory_space<vmem>>, vector<1x8x4xf32>
    %46 = vector.shape_cast %45 : vector<1x8x4xf32> to vector<8x4xf32>
    %cst_42 = arith.constant dense<0.000000e+00> : vector<8x288xf32>
    %47 = tpu.matmul %46, %44, %cst_42 {dimension_numbers = #tpu.dot_dimension_numbers<[1], [0], [0], [1], [0, 0, 1, 1], [], []>} : vector<8x4xf32>, vector<4x288xf32>, vector<8x288xf32> -> vector<8x288xf32>
    %48 = arith.addf %42, %47 : vector<8x288xf32>
    %c0_43 = arith.constant 0 : index
    %c0_44 = arith.constant 0 : index
    %c38 = arith.constant 38 : index
    %49 = vector.load %arg2[%c0_43, %c0_44, %c38] : memref<1x4x326xf32, #tpu.memory_space<vmem>>, vector<1x4x288xf32>
    %50 = vector.shape_cast %49 : vector<1x4x288xf32> to vector<4x288xf32>
    %c8 = arith.constant 8 : index
    %c0_45 = arith.constant 0 : index
    %c0_46 = arith.constant 0 : index
    %51 = vector.load %arg3[%c8, %c0_45, %c0_46] : memref<9x8x4xf32, #tpu.memory_space<vmem>>, vector<1x8x4xf32>
    %52 = vector.shape_cast %51 : vector<1x8x4xf32> to vector<8x4xf32>
    %cst_47 = arith.constant dense<0.000000e+00> : vector<8x288xf32>
    %53 = tpu.matmul %52, %50, %cst_47 {dimension_numbers = #tpu.dot_dimension_numbers<[1], [0], [0], [1], [0, 0, 1, 1], [], []>} : vector<8x4xf32>, vector<4x288xf32>, vector<8x288xf32> -> vector<8x288xf32>
    %54 = arith.addf %48, %53 : vector<8x288xf32>
    %c0_48 = arith.constant 0 : index
    %c0_49 = arith.constant 0 : index
    %55 = vector.load %arg4[%c0_48, %c0_49] : memref<8x1xf32, #tpu.memory_space<vmem>>, vector<8x1xf32>
    %56 = vector.broadcast %55 : vector<8x1xf32> to vector<8x288xf32>
    %57 = arith.addf %54, %56 : vector<8x288xf32>
    %cst_50 = arith.constant 0.000000e+00 : f32
    %58 = vector.broadcast %cst_50 : f32 to vector<8x288xf32>
    %59 = arith.cmpf ogt, %57, %58 : vector<8x288xf32>
    %cst_51 = arith.constant 0.00999999977 : f32
    %60 = vector.broadcast %cst_51 : f32 to vector<8x288xf32>
    %61 = arith.mulf %60, %57 : vector<8x288xf32>
    %62 = arith.select %59, %57, %61 : vector<8x288xi1>, vector<8x288xf32>
    %c0_52 = arith.constant 0 : index
    %c0_53 = arith.constant 0 : index
    %c0_54 = arith.constant 0 : index
    %63 = vector.load %arg5[%c0_52, %c0_53, %c0_54] : memref<1x8x288xf32, #tpu.memory_space<vmem>>, vector<1x8x288xf32>
    %64 = vector.shape_cast %63 : vector<1x8x288xf32> to vector<8x288xf32>
    %65 = vector.shape_cast %62 : vector<8x288xf32> to vector<1x8x288xf32>
    tpu.vector_store %arg5[%c0_52, %c0_53, %c0_54], %65 {strides = array<i32>} : memref<1x8x288xf32, #tpu.memory_space<vmem>>, vector<1x8x288xf32>,
    return
  }
  func.func @transform_0(%arg0: i32, %arg1: i32) -> (i32, i32, i32) {
    %c0_i32 = arith.constant 0 : i32
    %c0_i32_0 = arith.constant 0 : i32
    %c0_i32_1 = arith.constant 0 : i32
    return %arg0, %c0_i32, %c0_i32_0 : i32, i32, i32
  }
  func.func @transform_1(%arg0: i32, %arg1: i32) -> (i32, i32, i32) {
    %c0_i32 = arith.constant 0 : i32
    %c0_i32_0 = arith.constant 0 : i32
    %c0_i32_1 = arith.constant 0 : i32
    return %c0_i32, %arg1, %c0_i32_0 : i32, i32, i32
  }
  func.func @transform_2(%arg0: i32, %arg1: i32) -> (i32, i32) {
    %c0_i32 = arith.constant 0 : i32
    %c0_i32_0 = arith.constant 0 : i32
    return %arg1, %c0_i32 : i32, i32
  }
  func.func @transform_3(%arg0: i32, %arg1: i32) -> (i32, i32, i32) {
    %c0_i32 = arith.constant 0 : i32
    %c0_i32_0 = arith.constant 0 : i32
    return %arg0, %arg1, %c0_i32 : i32, i32, i32
  }
}

</mosaic_0001>

<llo_original>
// kernel: tpu_custom_call.1
$region0: #{tpu_custom_call.1}
  #allocation0 [shape = 'u32[]', space=smem, size = 0x4, offset = 0x4, fixed_abs, tag = 'smem constant byte address 0x4 - core index']
  #allocation1 [shape = 'u32[144,128]{1,0:T(1,128)}', space=vmem, size = 0x12000, scoped, tag = 'internal scratch']
  %s0 = inlined_call_operand.vmem [shape: f32[2,4,326], index: 0, kind: input, shape index: {}]
  %s1 = inlined_call_operand.vmem [shape: f32[9,8,4], index: 1, kind: input, shape index: {}]
  %s2 = inlined_call_operand.vmem [shape: f32[8,1], index: 2, kind: input, shape index: {}]
  %s3 = inlined_call_operand.hbm [shape: f32[2,8,288], index: 3, kind: output, shape index: {}]
  %s4 = sld [smem:[#allocation0]]
  $region45: #{tpu_custom_call.1} parent=0
    _
  %s6 = ssub.s32 1, %s4
  %s7 = scalar_select 0, %s6, %s4
  $region1: #{tpu_custom_call.1} parent=0
    #allocation2 [shape = 'u8[24576]{0}', space=vmem, size = 0x6000, scoped, tag = 'output window, operand 0']
    #allocation3 [shape = 's32[2]{0}', space=sflag, size = 0x8, scoped, tag = 'scoped memory for tpu_custom_call.1']
    %8 = vsyncpa [#allocation3], 0
    %s9 = scalar_lea.sflag [#allocation3], 1
    %10 = vsyncpa %s9, 0
    loop: start=0, step=1, limit=4
    $region2: #{tpu_custom_call.1} parent=1 // loop_pre_header
      _
    $region3: #{tpu_custom_call.1} parent=1 // loop_header
      %s12 = sphi 0, %s16
      %p13 = scmp.ge.s32.totalorder %s12, 4
      %s19 = sphi 0, %s31
      %s20 = sphi 0, %s27
      %s21 = sphi 0, %s19
      %s22 = sphi 0, %s20
      %s23 = sphi 0, %s21
      %s24 = sphi 0, %s22
      %s34 = sphi 0, %s36
      %s37 = sphi 0, %s34
      %s38 = sphi 0, %s37
      %s54 = sphi 0, %s38
      %s60 = sphi 0, %s62
      %s63 = sphi 0, %s60
      %s64 = sphi 0, %s63
      %s80 = sphi 0, %s64
      %s86 = sphi 0, %s88
      %s89 = sphi 0, %s86
      %s90 = sphi 0, %s89
      %s106 = sphi 0, %s90
      %s114 = sphi 0, %s116
      %s117 = sphi 0, %s114
      %s118 = sphi 0, %s117
      %s134 = sphi 0, %s118
    $region4: #{tpu_custom_call.1} parent=1 // loop_header_branch
      %15 = sbr.rel (%p13) target = $region8
    $region5: #{tpu_custom_call.1} parent=1 // loop_body
      %s17 = ssub.s32 %s12, 1
      %s18 = ssub.s32 %s12, 2
      %s25 = sadd.s32 1, %s20
      %p26 = scmp.ge.s32.totalorder %s25, 1
      %s27 = scalar_select %p26, 0, %s25
      %s28 = sadd.s32 1, %s19
      %s29 = scalar_select %p26, %s28, %s19
      %p30 = scmp.ge.s32.totalorder %s29, 2
      %s31 = scalar_select %p30, 0, %s29
      %s32 = ssub.s32 %s19, %s31
      %p33 = scmp.eq.s32.totalorder %s32, 0
      %s35 = sadd.s32 %s34, 1
      %s36 = scalar_select %p33, %s34, %s35
      %p39 = pneg %p33
      %p40 = scmp.eq.s32.totalorder %s12, 1
      %p41 = por %p39, %p40
      %p42 = scmp.ne.s32.totalorder %s34, %s37
      %p43 = scmp.eq.s32.totalorder %s12, 0
      %p44 = por %p42, %p43
      %p45 = scmp.ne.s32.totalorder %s34, %s37
      %p46 = scmp.eq.s32.totalorder %s17, 1
      %p47 = por %p45, %p46
      %p48 = scmp.ne.s32.totalorder %s37, %s38
      %p49 = scmp.eq.s32.totalorder %s17, 0
      %p50 = por %p48, %p49
      %p51 = scmp.ne.s32.totalorder %s37, %s38
      %p52 = scmp.eq.s32.totalorder %s18, 1
      %p53 = por %p51, %p52
      %p55 = scmp.ne.s32.totalorder %s38, %s54
      %p56 = scmp.eq.s32.totalorder %s18, 0
      %p57 = por %p55, %p56
      %s58 = ssub.s32 %s20, %s27
      %p59 = scmp.eq.s32.totalorder %s58, 0
      %s61 = sadd.s32 %s60, 1
      %s62 = scalar_select %p59, %s60, %s61
      %p65 = pneg %p59
      %p66 = scmp.eq.s32.totalorder %s12, 1
      %p67 = por %p65, %p66
      %p68 = scmp.ne.s32.totalorder %s60, %s63
      %p69 = scmp.eq.s32.totalorder %s12, 0
      %p70 = por %p68, %p69
      %p71 = scmp.ne.s32.totalorder %s60, %s63
      %p72 = scmp.eq.s32.totalorder %s17, 1
      %p73 = por %p71, %p72
      %p74 = scmp.ne.s32.totalorder %s63, %s64
      %p75 = scmp.eq.s32.totalorder %s17, 0
      %p76 = por %p74, %p75
      %p77 = scmp.ne.s32.totalorder %s63, %s64
      %p78 = scmp.eq.s32.totalorder %s18, 1
      %p79 = por %p77, %p78
      %p81 = scmp.ne.s32.totalorder %s64, %s80
      %p82 = scmp.eq.s32.totalorder %s18, 0
      %p83 = por %p81, %p82
      %s84 = ssub.s32 %s20, %s27
      %p85 = scmp.eq.s32.totalorder %s84, 0
      %s87 = sadd.s32 %s86, 1
      %s88 = scalar_select %p85, %s86, %s87
      %p91 = pneg %p85
      %p92 = scmp.eq.s32.totalorder %s12, 1
      %p93 = por %p91, %p92
      %p94 = scmp.ne.s32.totalorder %s86, %s89
      %p95 = scmp.eq.s32.totalorder %s12, 0
      %p96 = por %p94, %p95
      %p97 = scmp.ne.s32.totalorder %s86, %s89
      %p98 = scmp.eq.s32.totalorder %s17, 1
      %p99 = por %p97, %p98
      %p100 = scmp.ne.s32.totalorder %s89, %s90
      %p101 = scmp.eq.s32.totalorder %s17, 0
      %p102 = por %p100, %p101
      %p103 = scmp.ne.s32.totalorder %s89, %s90
      %p104 = scmp.eq.s32.totalorder %s18, 1
      %p105 = por %p103, %p104
      %p107 = scmp.ne.s32.totalorder %s90, %s106
      %p108 = scmp.eq.s32.totalorder %s18, 0
      %p109 = por %p107, %p108
      %s110 = ssub.s32 %s19, %s31
      %s111 = ssub.s32 %s20, %s27
      %s112 = sor.u32 %s110, %s111
      %p113 = scmp.eq.s32.totalorder %s112, 0
      %s115 = sadd.s32 %s114, 1
      %s116 = scalar_select %p113, %s114, %s115
      %p119 = pneg %p113
      %p120 = scmp.eq.s32.totalorder %s12, 1
      %p121 = por %p119, %p120
      %p122 = scmp.ne.s32.totalorder %s114, %s117
      %p123 = scmp.eq.s32.totalorder %s12, 0
      %p124 = por %p122, %p123
      %p125 = scmp.ne.s32.totalorder %s114, %s117
      %p126 = scmp.eq.s32.totalorder %s17, 1
      %p127 = por %p125, %p126
      %p128 = scmp.ne.s32.totalorder %s117, %s118
      %p129 = scmp.eq.s32.totalorder %s17, 0
      %p130 = por %p128, %p129
      %p131 = scmp.ne.s32.totalorder %s117, %s118
      %p132 = scmp.eq.s32.totalorder %s18, 1
      %p133 = por %p131, %p132
      %p135 = scmp.ne.s32.totalorder %s118, %s134
      %p136 = scmp.eq.s32.totalorder %s18, 0
      %p137 = por %p135, %p136
      %p138 = scmp.le.s32.totalorder 1, %s12
      %p139 = scmp.lt.s32.totalorder %s12, 3
      %p140 = pnand %p138, %p139
      %p141 = pneg %p140
      // Predicated region
      $region9: #{tpu_custom_call.1} parent=5 // pred_check
        _
      $region10: #{tpu_custom_call.1} parent=5 // pred_check_branch
        %143 = sbr.rel (%p140) target = $region12
      $region11: #{tpu_custom_call.1} parent=5 // pred_region
        %s144 = ssub.s32 %s12, 1
        // Predicated region
        $region13: #{tpu_custom_call.1} parent=11 // pred_check
          %p145 = pneg %p76
        $region14: #{tpu_custom_call.1} parent=11 // pred_check_branch
          %147 = sbr.rel (%p145) target = $region16
        $region15: #{tpu_custom_call.1} parent=11 // pred_region
          %p148 = scmp.lt.s32.totalorder %s22, 0
          %s149 = scalar_select %p148, %s22, 0
          %s150 = smul.addr %s149, 8
          %s151 = scalar_lea.vmem %s1, %s150
        $region16: #{tpu_custom_call.1} parent=11 // pred_fallthru
          _
        // Predicated region
        $region17: #{tpu_custom_call.1} parent=11 // pred_check
          %p152 = pneg %p102
        $region18: #{tpu_custom_call.1} parent=11 // pred_check_branch
          %154 = sbr.rel (%p152) target = $region20
        $region19: #{tpu_custom_call.1} parent=11 // pred_region
          %p155 = scmp.lt.s32.totalorder %s22, 0
          %s156 = scalar_select %p155, %s22, 0
          %s157 = smul.addr %s156, 8
          %s158 = scalar_lea.vmem %s2, %s157
        $region20: #{tpu_custom_call.1} parent=11 // pred_fallthru
          _
      $region12: #{tpu_custom_call.1} parent=5 // pred_fallthru
        _
      %p159 = scmp.lt.s32.totalorder %s12, 2
      // Predicated region
      $region21: #{tpu_custom_call.1} parent=5 // pred_check
        %p160 = pneg %p159
      $region22: #{tpu_custom_call.1} parent=5 // pred_check_branch
        %162 = sbr.rel (%p160) target = $region24
      $region23: #{tpu_custom_call.1} parent=5 // pred_region
        // Predicated region
        $region25: #{tpu_custom_call.1} parent=23 // pred_check
          %p163 = pneg %p44
        $region26: #{tpu_custom_call.1} parent=23 // pred_check_branch
          %165 = sbr.rel (%p163) target = $region28
        $region27: #{tpu_custom_call.1} parent=23 // pred_region
          %p166 = scmp.lt.s32.totalorder %s19, 1
          %s167 = scalar_select %p166, %s19, 1
          %s168 = smul.addr %s167, 3
          %s169 = smul.addr %s168, 4
          %s170 = scalar_lea.vmem %s0, %s169
        $region28: #{tpu_custom_call.1} parent=23 // pred_fallthru
          _
      $region24: #{tpu_custom_call.1} parent=5 // pred_fallthru
        _
      %p171 = scmp.le.s32.totalorder 1, %s12
      %p172 = scmp.lt.s32.totalorder %s12, 3
      %p173 = pnand %p171, %p172
      %p174 = pneg %p173
      // Predicated region
      $region29: #{tpu_custom_call.1} parent=5 // pred_check
        _
      $region30: #{tpu_custom_call.1} parent=5 // pred_check_branch
        %176 = sbr.rel (%p173) target = $region32
      $region31: #{tpu_custom_call.1} parent=5 // pred_region
        %s177 = ssub.s32 %s12, 1
        %p178 = scmp.lt.s32.totalorder %s21, 1
        %s179 = scalar_select %p178, %s21, 1
        %s180 = smul.addr %s179, 3
        %s181 = smul.addr %s180, 4
        %s182 = scalar_lea.vmem %s0, %s181
        %p183 = pneg %p50
        %p184 = pneg %p47
        %p185 = scmp.lt.s32.totalorder %s22, 0
        %s186 = scalar_select %p185, %s22, 0
        %s187 = smul.addr %s186, 8
        %s188 = scalar_lea.vmem %s1, %s187
        %p189 = pneg %p76
        %p190 = pneg %p73
        %p191 = scmp.lt.s32.totalorder %s22, 0
        %s192 = scalar_select %p191, %s22, 0
        %s193 = smul.addr %s192, 8
        %s194 = scalar_lea.vmem %s2, %s193
        %p195 = pneg %p102
        %p196 = pneg %p99
        %p197 = pneg %p130
        %p198 = pneg %p127
        %s199 = sand.u32 %s117, 1
        %s200 = scalar_lea.sflag [#allocation3], %s199
        %s201 = sand.u32 %s117, 1
        %s202 = smul.addr %s201, 24
        %s203 = scalar_lea.vmem [#allocation2], %s202
        %p204 = scmp.lt.s32.totalorder %s21, 1
        %s205 = scalar_select %p204, %s21, 1
        %s206 = smul.addr %s205, 3
        %s207 = smul.addr %s206, 4
        %s208 = scalar_lea.vmem %s0, %s207
        %p209 = scmp.lt.s32.totalorder %s22, 0
        %s210 = scalar_select %p209, %s22, 0
        %s211 = smul.addr %s210, 8
        %s212 = scalar_lea.vmem %s1, %s211
        %p213 = scmp.lt.s32.totalorder %s22, 0
        %s214 = scalar_select %p213, %s22, 0
        %s215 = smul.addr %s214, 8
        %s216 = scalar_lea.vmem %s2, %s215
        %v217 = vld [vmem:[%s208] sm:$0xff]
        %v218 = vld [vmem:[%s208 + $0x8] sm:$0xf]
        %v219 = vld [vmem:[%s212] sm:$0xff]
        %s220 = scalar_lea.vmem %s212, 8
        %v221 = vld [vmem:[%s220] sm:$0xff]
        %v224 = vcombine.high %v217, %v217
        %225 = vrot.lane.b32.xlu0 %v217, 127
        %v226 = vpop.permute.xlu0 %225
        %227 = vrot.lane.b32.xlu0 %v224, 127
        %v228 = vpop.permute.xlu0 %227
        %229 = vrot.lane.b32.xlu0 %v218, 127
        %v230 = vpop.permute.xlu0 %229
        %vm231 = vcmask 1039360
        %v232 = vsel %vm231, %v226, %v228
        %v233 = vsel %vm231, %v228, %v230
        %vm234 = vcmask 31744
        %v236 = vsel %vm234, %v221, 0
        %vm238 = vcmask 1043456
        %v239 = vsel %vm238, %v232, 0
        %v241 = vsel %vm238, %v233, 0
        %v243 = vsel %vm238, %v230, 0
        %245 = vmatprep.subr.mxu0 %v241
        %246 = vmatpush1.msra.mxu0 %v239
        %247 = vmatprep.subr.mxu0 0.0
        %248 = vmatpush1.msra.mxu0 0.0
        %249 = vmatprep.subr.mxu0 0.0
        %250 = vmatpush1.msra.mxu0 0.0
        %251 = vmatprep.subr.mxu0 0.0
        %252 = vmatpush1.msra.mxu0 0.0
        %253 = vmatprep.subr.mxu0 0.0
        %254 = vmatpush1.msra.mxu0 0.0
        %255 = vmatprep.subr.mxu0 0.0
        %256 = vmatpush1.msra.mxu0 0.0
        %257 = vmatprep.subr.mxu0 0.0
        %258 = vmatpush1.msra.mxu0 0.0
        %259 = vmatprep.subr.mxu0 0.0
        %260 = vmatpush1.msra.mxu0 0.0
        %261 = vmatprep.subr.mxu0 0.0
        %262 = vmatpush1.msra.mxu0 0.0
        %263 = vmatprep.subr.mxu0 0.0
        %264 = vmatpush1.msra.mxu0 0.0
        %265 = vmatprep.subr.mxu0 0.0
        %266 = vmatpush1.msra.mxu0 0.0
        %267 = vmatprep.subr.mxu0 0.0
        %268 = vmatpush1.msra.mxu0 0.0
        %269 = vmatprep.subr.mxu0 0.0
        %270 = vmatpush1.msra.mxu0 0.0
        %271 = vmatprep.subr.mxu0 0.0
        %272 = vmatpush1.msra.mxu0 0.0
        %273 = vmatprep.subr.mxu0 0.0
        %274 = vmatpush1.msra.mxu0 0.0
        %275 = vmatprep.subr.mxu0 0.0
        %276 = vmatpush1.msra.mxu0 0.0
        %277 = vmatprep.subr.mxu0 0.0
        %278 = vmatpush1.msra.mxu0 0.0
        %279 = vmatprep.subr.mxu0 0.0
        %280 = vmatpush1.msra.mxu0 0.0
        %281 = vmatprep.subr.mxu0 0.0
        %282 = vmatpush1.msra.mxu0 0.0
        %283 = vmatprep.subr.mxu0 0.0
        %284 = vmatpush1.msra.mxu0 0.0
        %285 = vmatprep.subr.mxu0 0.0
        %286 = vmatpush1.msra.mxu0 0.0
        %287 = vmatprep.subr.mxu0 0.0
        %288 = vmatpush1.msra.mxu0 0.0
        %289 = vmatprep.subr.mxu0 0.0
        %290 = vmatpush1.msra.mxu0 0.0
        %291 = vmatprep.subr.mxu0 0.0
        %292 = vmatpush1.msra.mxu0 0.0
        %293 = vmatprep.subr.mxu0 0.0
        %294 = vmatpush1.msra.mxu0 0.0
        %295 = vmatprep.subr.mxu0 0.0
        %296 = vmatpush1.msra.mxu0 0.0
        %297 = vmatprep.subr.mxu0 0.0
        %298 = vmatpush1.msra.mxu0 0.0
        %299 = vmatprep.subr.mxu0 0.0
        %300 = vmatpush1.msra.mxu0 0.0
        %301 = vmatprep.subr.mxu0 0.0
        %302 = vmatpush1.msra.mxu0 0.0
        %303 = vmatprep.subr.mxu0 0.0
        %304 = vmatpush1.msra.mxu0 0.0
        %305 = vmatprep.subr.mxu0 0.0
        %306 = vmatpush1.msra.mxu0 0.0
        %307 = vmatprep.subr.mxu0 0.0
        %308 = vmatpush1.msra.mxu0 0.0
        %309 = vmatprep.mubr.f32.mxu0 0.0
        %310 = vmatmul.mubr.f32.gmra.mrb[0].mxu0 %v236
        %v311 = vpop.f32.mrb[0].mxu0
        %v312 = vadd.f32 0.0, %v311
        %v313 = vpop.f32.mrb[0].mxu0
        %v314 = vadd.f32 0.0, %v313
        %315 = vdwg.mxu0
        %316 = vmatprep.subr.mxu0 0.0
        %317 = vmatpush1.msra.mxu0 %v243
        %318 = vmatprep.subr.mxu0 0.0
        %319 = vmatpush1.msra.mxu0 0.0
        %320 = vmatprep.subr.mxu0 0.0
        %321 = vmatpush1.msra.mxu0 0.0
        %322 = vmatprep.subr.mxu0 0.0
        %323 = vmatpush1.msra.mxu0 0.0
        %324 = vmatprep.subr.mxu0 0.0
        %325 = vmatpush1.msra.mxu0 0.0
        %326 = vmatprep.subr.mxu0 0.0
        %327 = vmatpush1.msra.mxu0 0.0
        %328 = vmatprep.subr.mxu0 0.0
        %329 = vmatpush1.msra.mxu0 0.0
        %330 = vmatprep.subr.mxu0 0.0
        %331 = vmatpush1.msra.mxu0 0.0
        %332 = vmatprep.subr.mxu0 0.0
        %333 = vmatpush1.msra.mxu0 0.0
        %334 = vmatprep.subr.mxu0 0.0
        %335 = vmatpush1.msra.mxu0 0.0
        %336 = vmatprep.subr.mxu0 0.0
        %337 = vmatpush1.msra.mxu0 0.0
        %338 = vmatprep.subr.mxu0 0.0
        %339 = vmatpush1.msra.mxu0 0.0
        %340 = vmatprep.subr.mxu0 0.0
        %341 = vmatpush1.msra.mxu0 0.0
        %342 = vmatprep.subr.mxu0 0.0
        %343 = vmatpush1.msra.mxu0 0.0
        %344 = vmatprep.subr.mxu0 0.0
        %345 = vmatpush1.msra.mxu0 0.0
        %346 = vmatprep.subr.mxu0 0.0
        %347 = vmatpush1.msra.mxu0 0.0
        %348 = vmatprep.subr.mxu0 0.0
        %349 = vmatpush1.msra.mxu0 0.0
        %350 = vmatprep.subr.mxu0 0.0
        %351 = vmatpush1.msra.mxu0 0.0
        %352 = vmatprep.subr.mxu0 0.0
        %353 = vmatpush1.msra.mxu0 0.0
        %354 = vmatprep.subr.mxu0 0.0
        %355 = vmatpush1.msra.mxu0 0.0
        %356 = vmatprep.subr.mxu0 0.0
        %357 = vmatpush1.msra.mxu0 0.0
        %358 = vmatprep.subr.mxu0 0.0
        %359 = vmatpush1.msra.mxu0 0.0
        %360 = vmatprep.subr.mxu0 0.0
        %361 = vmatpush1.msra.mxu0 0.0
        %362 = vmatprep.subr.mxu0 0.0
        %363 = vmatpush1.msra.mxu0 0.0
        %364 = vmatprep.subr.mxu0 0.0
        %365 = vmatpush1.msra.mxu0 0.0
        %366 = vmatprep.subr.mxu0 0.0
        %367 = vmatpush1.msra.mxu0 0.0
        %368 = vmatprep.subr.mxu0 0.0
        %369 = vmatpush1.msra.mxu0 0.0
        %370 = vmatprep.subr.mxu0 0.0
        %371 = vmatpush1.msra.mxu0 0.0
        %372 = vmatprep.subr.mxu0 0.0
        %373 = vmatpush1.msra.mxu0 0.0
        %374 = vmatprep.subr.mxu0 0.0
        %375 = vmatpush1.msra.mxu0 0.0
        %376 = vmatprep.subr.mxu0 0.0
        %377 = vmatpush1.msra.mxu0 0.0
        %378 = vmatprep.subr.mxu0 0.0
        %379 = vmatpush1.msra.mxu0 0.0
        %380 = vmatprep.mubr.f32.mxu0 0.0
        %381 = vmatmul.mubr.f32.gmra.mrb[0].mxu0 %v236
        %v382 = vpop.f32.mrb[0].mxu0
        %v383 = vadd.f32 0.0, %v382
        %v384 = vpop.f32.mrb[0].mxu0
        %385 = vdwg.mxu0
        %v387 = vsel %vm234, %v219, 0
        %v389 = vsel %vm238, %v217, 0
        %v391 = vsel %vm238, %v224, 0
        %v393 = vsel %vm238, %v218, 0
        %395 = vmatprep.subr.mxu0 %v391
        %396 = vmatpush1.msra.mxu0 %v389
        %397 = vmatprep.subr.mxu0 0.0
        %398 = vmatpush1.msra.mxu0 0.0
        %399 = vmatprep.subr.mxu0 0.0
        %400 = vmatpush1.msra.mxu0 0.0
        %401 = vmatprep.subr.mxu0 0.0
        %402 = vmatpush1.msra.mxu0 0.0
        %403 = vmatprep.subr.mxu0 0.0
        %404 = vmatpush1.msra.mxu0 0.0
        %405 = vmatprep.subr.mxu0 0.0
        %406 = vmatpush1.msra.mxu0 0.0
        %407 = vmatprep.subr.mxu0 0.0
        %408 = vmatpush1.msra.mxu0 0.0
        %409 = vmatprep.subr.mxu0 0.0
        %410 = vmatpush1.msra.mxu0 0.0
        %411 = vmatprep.subr.mxu0 0.0
        %412 = vmatpush1.msra.mxu0 0.0
        %413 = vmatprep.subr.mxu0 0.0
        %414 = vmatpush1.msra.mxu0 0.0
        %415 = vmatprep.subr.mxu0 0.0
        %416 = vmatpush1.msra.mxu0 0.0
        %417 = vmatprep.subr.mxu0 0.0
        %418 = vmatpush1.msra.mxu0 0.0
        %419 = vmatprep.subr.mxu0 0.0
        %420 = vmatpush1.msra.mxu0 0.0
        %421 = vmatprep.subr.mxu0 0.0
        %422 = vmatpush1.msra.mxu0 0.0
        %423 = vmatprep.subr.mxu0 0.0
        %424 = vmatpush1.msra.mxu0 0.0
        %425 = vmatprep.subr.mxu0 0.0
        %426 = vmatpush1.msra.mxu0 0.0
        %427 = vmatprep.subr.mxu0 0.0
        %428 = vmatpush1.msra.mxu0 0.0
        %429 = vmatprep.subr.mxu0 0.0
        %430 = vmatpush1.msra.mxu0 0.0
        %431 = vmatprep.subr.mxu0 0.0
        %432 = vmatpush1.msra.mxu0 0.0
        %433 = vmatprep.subr.mxu0 0.0
        %434 = vmatpush1.msra.mxu0 0.0
        %435 = vmatprep.subr.mxu0 0.0
        %436 = vmatpush1.msra.mxu0 0.0
        %437 = vmatprep.subr.mxu0 0.0
        %438 = vmatpush1.msra.mxu0 0.0
        %439 = vmatprep.subr.mxu0 0.0
        %440 = vmatpush1.msra.mxu0 0.0
        %441 = vmatprep.subr.mxu0 0.0
        %442 = vmatpush1.msra.mxu0 0.0
        %443 = vmatprep.subr.mxu0 0.0
        %444 = vmatpush1.msra.mxu0 0.0
        %445 = vmatprep.subr.mxu0 0.0
        %446 = vmatpush1.msra.mxu0 0.0
        %447 = vmatprep.subr.mxu0 0.0
        %448 = vmatpush1.msra.mxu0 0.0
        %449 = vmatprep.subr.mxu0 0.0
        %450 = vmatpush1.msra.mxu0 0.0
        %451 = vmatprep.subr.mxu0 0.0
        %452 = vmatpush1.msra.mxu0 0.0
        %453 = vmatprep.subr.mxu0 0.0
        %454 = vmatpush1.msra.mxu0 0.0
        %455 = vmatprep.subr.mxu0 0.0
        %456 = vmatpush1.msra.mxu0 0.0
        %457 = vmatprep.subr.mxu0 0.0
        %458 = vmatpush1.msra.mxu0 0.0
        %459 = vmatprep.mubr.f32.mxu0 0.0
        %460 = vmatmul.mubr.f32.gmra.mrb[0].mxu0 %v387
        %v461 = vpop.f32.mrb[0].mxu0
        %v462 = vadd.f32 %v312, %v461
        %v463 = vpop.f32.mrb[0].mxu0
        %v464 = vadd.f32 %v314, %v463
        %465 = vdwg.mxu0
        %466 = vmatprep.subr.mxu0 0.0
        %467 = vmatpush1.msra.mxu0 %v393
        %468 = vmatprep.subr.mxu0 0.0
        %469 = vmatpush1.msra.mxu0 0.0
        %470 = vmatprep.subr.mxu0 0.0
        %471 = vmatpush1.msra.mxu0 0.0
        %472 = vmatprep.subr.mxu0 0.0
        %473 = vmatpush1.msra.mxu0 0.0
        %474 = vmatprep.subr.mxu0 0.0
        %475 = vmatpush1.msra.mxu0 0.0
        %476 = vmatprep.subr.mxu0 0.0
        %477 = vmatpush1.msra.mxu0 0.0
        %478 = vmatprep.subr.mxu0 0.0
        %479 = vmatpush1.msra.mxu0 0.0
        %480 = vmatprep.subr.mxu0 0.0
        %481 = vmatpush1.msra.mxu0 0.0
        %482 = vmatprep.subr.mxu0 0.0
        %483 = vmatpush1.msra.mxu0 0.0
        %484 = vmatprep.subr.mxu0 0.0
        %485 = vmatpush1.msra.mxu0 0.0
        %486 = vmatprep.subr.mxu0 0.0
        %487 = vmatpush1.msra.mxu0 0.0
        %488 = vmatprep.subr.mxu0 0.0
        %489 = vmatpush1.msra.mxu0 0.0
        %490 = vmatprep.subr.mxu0 0.0
        %491 = vmatpush1.msra.mxu0 0.0
        %492 = vmatprep.subr.mxu0 0.0
        %493 = vmatpush1.msra.mxu0 0.0
        %494 = vmatprep.subr.mxu0 0.0
        %495 = vmatpush1.msra.mxu0 0.0
        %496 = vmatprep.subr.mxu0 0.0
        %497 = vmatpush1.msra.mxu0 0.0
        %498 = vmatprep.subr.mxu0 0.0
        %499 = vmatpush1.msra.mxu0 0.0
        %500 = vmatprep.subr.mxu0 0.0
        %501 = vmatpush1.msra.mxu0 0.0
        %502 = vmatprep.subr.mxu0 0.0
        %503 = vmatpush1.msra.mxu0 0.0
        %504 = vmatprep.subr.mxu0 0.0
        %505 = vmatpush1.msra.mxu0 0.0
        %506 = vmatprep.subr.mxu0 0.0
        %507 = vmatpush1.msra.mxu0 0.0
        %508 = vmatprep.subr.mxu0 0.0
        %509 = vmatpush1.msra.mxu0 0.0
        %510 = vmatprep.subr.mxu0 0.0
        %511 = vmatpush1.msra.mxu0 0.0
        %512 = vmatprep.subr.mxu0 0.0
        %513 = vmatpush1.msra.mxu0 0.0
        %514 = vmatprep.subr.mxu0 0.0
        %515 = vmatpush1.msra.mxu0 0.0
        %516 = vmatprep.subr.mxu0 0.0
        %517 = vmatpush1.msra.mxu0 0.0
        %518 = vmatprep.subr.mxu0 0.0
        %519 = vmatpush1.msra.mxu0 0.0
        %520 = vmatprep.subr.mxu0 0.0
        %521 = vmatpush1.msra.mxu0 0.0
        %522 = vmatprep.subr.mxu0 0.0
        %523 = vmatpush1.msra.mxu0 0.0
        %524 = vmatprep.subr.mxu0 0.0
        %525 = vmatpush1.msra.mxu0 0.0
        %526 = vmatprep.subr.mxu0 0.0
        %527 = vmatpush1.msra.mxu0 0.0
        %528 = vmatprep.subr.mxu0 0.0
        %529 = vmatpush1.msra.mxu0 0.0
        %530 = vmatprep.mubr.f32.mxu0 0.0
        %531 = vmatmul.mubr.f32.gmra.mrb[0].mxu0 %v387
        %v532 = vpop.f32.mrb[0].mxu0
        %v533 = vadd.f32 %v383, %v532
        %v534 = vpop.f32.mrb[0].mxu0
        %535 = vdwg.mxu0
        %v536 = vld [vmem:[%s208] sm:$0xff]
        %v537 = vld [vmem:[%s208 + $0x8] sm:$0xf]
        %s538 = scalar_lea.vmem %s212, 16
        %v539 = vld [vmem:[%s538] sm:$0xff]
        %v542 = vcombine.high %v536, %v536
        %543 = vrot.lane.b32.xlu0 %v536, 126
        %v544 = vpop.permute.xlu0 %543
        %545 = vrot.lane.b32.xlu0 %v542, 126
        %v546 = vpop.permute.xlu0 %545
        %547 = vrot.lane.b32.xlu0 %v537, 126
        %v548 = vpop.permute.xlu0 %547
        %vm549 = vcmask 1031168
        %v550 = vsel %vm549, %v544, %v546
        %v551 = vsel %vm549, %v546, %v548
        %v553 = vsel %vm234, %v539, 0
        %v555 = vsel %vm238, %v550, 0
        %v557 = vsel %vm238, %v551, 0
        %v559 = vsel %vm238, %v548, 0
        %561 = vmatprep.subr.mxu0 %v557
        %562 = vmatpush1.msra.mxu0 %v555
        %563 = vmatprep.subr.mxu0 0.0
        %564 = vmatpush1.msra.mxu0 0.0
        %565 = vmatprep.subr.mxu0 0.0
        %566 = vmatpush1.msra.mxu0 0.0
        %567 = vmatprep.subr.mxu0 0.0
        %568 = vmatpush1.msra.mxu0 0.0
        %569 = vmatprep.subr.mxu0 0.0
        %570 = vmatpush1.msra.mxu0 0.0
        %571 = vmatprep.subr.mxu0 0.0
        %572 = vmatpush1.msra.mxu0 0.0
        %573 = vmatprep.subr.mxu0 0.0
        %574 = vmatpush1.msra.mxu0 0.0
        %575 = vmatprep.subr.mxu0 0.0
        %576 = vmatpush1.msra.mxu0 0.0
        %577 = vmatprep.subr.mxu0 0.0
        %578 = vmatpush1.msra.mxu0 0.0
        %579 = vmatprep.subr.mxu0 0.0
        %580 = vmatpush1.msra.mxu0 0.0
        %581 = vmatprep.subr.mxu0 0.0
        %582 = vmatpush1.msra.mxu0 0.0
        %583 = vmatprep.subr.mxu0 0.0
        %584 = vmatpush1.msra.mxu0 0.0
        %585 = vmatprep.subr.mxu0 0.0
        %586 = vmatpush1.msra.mxu0 0.0
        %587 = vmatprep.subr.mxu0 0.0
        %588 = vmatpush1.msra.mxu0 0.0
        %589 = vmatprep.subr.mxu0 0.0
        %590 = vmatpush1.msra.mxu0 0.0
        %591 = vmatprep.subr.mxu0 0.0
        %592 = vmatpush1.msra.mxu0 0.0
        %593 = vmatprep.subr.mxu0 0.0
        %594 = vmatpush1.msra.mxu0 0.0
        %595 = vmatprep.subr.mxu0 0.0
        %596 = vmatpush1.msra.mxu0 0.0
        %597 = vmatprep.subr.mxu0 0.0
        %598 = vmatpush1.msra.mxu0 0.0
        %599 = vmatprep.subr.mxu0 0.0
        %600 = vmatpush1.msra.mxu0 0.0
        %601 = vmatprep.subr.mxu0 0.0
        %602 = vmatpush1.msra.mxu0 0.0
        %603 = vmatprep.subr.mxu0 0.0
        %604 = vmatpush1.msra.mxu0 0.0
        %605 = vmatprep.subr.mxu0 0.0
        %606 = vmatpush1.msra.mxu0 0.0
        %607 = vmatprep.subr.mxu0 0.0
        %608 = vmatpush1.msra.mxu0 0.0
        %609 = vmatprep.subr.mxu0 0.0
        %610 = vmatpush1.msra.mxu0 0.0
        %611 = vmatprep.subr.mxu0 0.0
        %612 = vmatpush1.msra.mxu0 0.0
        %613 = vmatprep.subr.mxu0 0.0
        %614 = vmatpush1.msra.mxu0 0.0
        %615 = vmatprep.subr.mxu0 0.0
        %616 = vmatpush1.msra.mxu0 0.0
        %617 = vmatprep.subr.mxu0 0.0
        %618 = vmatpush1.msra.mxu0 0.0
        %619 = vmatprep.subr.mxu0 0.0
        %620 = vmatpush1.msra.mxu0 0.0
        %621 = vmatprep.subr.mxu0 0.0
        %622 = vmatpush1.msra.mxu0 0.0
        %623 = vmatprep.subr.mxu0 0.0
        %624 = vmatpush1.msra.mxu0 0.0
        %625 = vmatprep.mubr.f32.mxu0 0.0
        %626 = vmatmul.mubr.f32.gmra.mrb[0].mxu0 %v553
        %v627 = vpop.f32.mrb[0].mxu0
        %v628 = vadd.f32 0.0, %v627
        %v629 = vpop.f32.mrb[0].mxu0
        %v630 = vadd.f32 0.0, %v629
        %631 = vdwg.mxu0
        %632 = vmatprep.subr.mxu0 0.0
        %633 = vmatpush1.msra.mxu0 %v559
        %634 = vmatprep.subr.mxu0 0.0
        %635 = vmatpush1.msra.mxu0 0.0
        %636 = vmatprep.subr.mxu0 0.0
        %637 = vmatpush1.msra.mxu0 0.0
        %638 = vmatprep.subr.mxu0 0.0
        %639 = vmatpush1.msra.mxu0 0.0
        %640 = vmatprep.subr.mxu0 0.0
        %641 = vmatpush1.msra.mxu0 0.0
        %642 = vmatprep.subr.mxu0 0.0
        %643 = vmatpush1.msra.mxu0 0.0
        %644 = vmatprep.subr.mxu0 0.0
        %645 = vmatpush1.msra.mxu0 0.0
        %646 = vmatprep.subr.mxu0 0.0
        %647 = vmatpush1.msra.mxu0 0.0
        %648 = vmatprep.subr.mxu0 0.0
        %649 = vmatpush1.msra.mxu0 0.0
        %650 = vmatprep.subr.mxu0 0.0
        %651 = vmatpush1.msra.mxu0 0.0
        %652 = vmatprep.subr.mxu0 0.0
        %653 = vmatpush1.msra.mxu0 0.0
        %654 = vmatprep.subr.mxu0 0.0
        %655 = vmatpush1.msra.mxu0 0.0
        %656 = vmatprep.subr.mxu0 0.0
        %657 = vmatpush1.msra.mxu0 0.0
        %658 = vmatprep.subr.mxu0 0.0
        %659 = vmatpush1.msra.mxu0 0.0
        %660 = vmatprep.subr.mxu0 0.0
        %661 = vmatpush1.msra.mxu0 0.0
        %662 = vmatprep.subr.mxu0 0.0
        %663 = vmatpush1.msra.mxu0 0.0
        %664 = vmatprep.subr.mxu0 0.0
        %665 = vmatpush1.msra.mxu0 0.0
        %666 = vmatprep.subr.mxu0 0.0
        %667 = vmatpush1.msra.mxu0 0.0
        %668 = vmatprep.subr.mxu0 0.0
        %669 = vmatpush1.msra.mxu0 0.0
        %670 = vmatprep.subr.mxu0 0.0
        %671 = vmatpush1.msra.mxu0 0.0
        %672 = vmatprep.subr.mxu0 0.0
        %673 = vmatpush1.msra.mxu0 0.0
        %674 = vmatprep.subr.mxu0 0.0
        %675 = vmatpush1.msra.mxu0 0.0
        %676 = vmatprep.subr.mxu0 0.0
        %677 = vmatpush1.msra.mxu0 0.0
        %678 = vmatprep.subr.mxu0 0.0
        %679 = vmatpush1.msra.mxu0 0.0
        %680 = vmatprep.subr.mxu0 0.0
        %681 = vmatpush1.msra.mxu0 0.0
        %682 = vmatprep.subr.mxu0 0.0
        %683 = vmatpush1.msra.mxu0 0.0
        %684 = vmatprep.subr.mxu0 0.0
        %685 = vmatpush1.msra.mxu0 0.0
        %686 = vmatprep.subr.mxu0 0.0
        %687 = vmatpush1.msra.mxu0 0.0
        %688 = vmatprep.subr.mxu0 0.0
        %689 = vmatpush1.msra.mxu0 0.0
        %690 = vmatprep.subr.mxu0 0.0
        %691 = vmatpush1.msra.mxu0 0.0
        %692 = vmatprep.subr.mxu0 0.0
        %693 = vmatpush1.msra.mxu0 0.0
        %694 = vmatprep.subr.mxu0 0.0
        %695 = vmatpush1.msra.mxu0 0.0
        %696 = vmatprep.mubr.f32.mxu0 0.0
        %697 = vmatmul.mubr.f32.gmra.mrb[0].mxu0 %v553
        %v698 = vpop.f32.mrb[0].mxu0
        %v699 = vadd.f32 0.0, %v698
        %v700 = vpop.f32.mrb[0].mxu0
        %701 = vdwg.mxu0
        %v702 = vadd.f32 %v462, %v628
        %v703 = vadd.f32 %v464, %v630
        %v704 = vadd.f32 %v533, %v699
        %v705 = vld [vmem:[%s208] sm:$0xff]
        %v706 = vld [vmem:[%s208 + $0x8] sm:$0xf]
        %s707 = scalar_lea.vmem %s212, 24
        %v708 = vld [vmem:[%s707] sm:$0xff]
        %v711 = vcombine.high %v705, %v705
        %712 = vrot.lane.b32.xlu0 %v705, 110
        %v713 = vpop.permute.xlu0 %712
        %714 = vrot.lane.b32.xlu0 %v711, 110
        %v715 = vpop.permute.xlu0 %714
        %716 = vrot.lane.b32.xlu0 %v706, 110
        %v717 = vpop.permute.xlu0 %716
        %vm718 = vcmask 900096
        %v719 = vsel %vm718, %v713, %v715
        %v720 = vsel %vm718, %v715, %v717
        %v722 = vsel %vm234, %v708, 0
        %v724 = vsel %vm238, %v719, 0
        %v726 = vsel %vm238, %v720, 0
        %v728 = vsel %vm238, %v717, 0
        %730 = vmatprep.subr.mxu0 %v726
        %731 = vmatpush1.msra.mxu0 %v724
        %732 = vmatprep.subr.mxu0 0.0
        %733 = vmatpush1.msra.mxu0 0.0
        %734 = vmatprep.subr.mxu0 0.0
        %735 = vmatpush1.msra.mxu0 0.0
        %736 = vmatprep.subr.mxu0 0.0
        %737 = vmatpush1.msra.mxu0 0.0
        %738 = vmatprep.subr.mxu0 0.0
        %739 = vmatpush1.msra.mxu0 0.0
        %740 = vmatprep.subr.mxu0 0.0
        %741 = vmatpush1.msra.mxu0 0.0
        %742 = vmatprep.subr.mxu0 0.0
        %743 = vmatpush1.msra.mxu0 0.0
        %744 = vmatprep.subr.mxu0 0.0
        %745 = vmatpush1.msra.mxu0 0.0
        %746 = vmatprep.subr.mxu0 0.0
        %747 = vmatpush1.msra.mxu0 0.0
        %748 = vmatprep.subr.mxu0 0.0
        %749 = vmatpush1.msra.mxu0 0.0
        %750 = vmatprep.subr.mxu0 0.0
        %751 = vmatpush1.msra.mxu0 0.0
        %752 = vmatprep.subr.mxu0 0.0
        %753 = vmatpush1.msra.mxu0 0.0
        %754 = vmatprep.subr.mxu0 0.0
        %755 = vmatpush1.msra.mxu0 0.0
        %756 = vmatprep.subr.mxu0 0.0
        %757 = vmatpush1.msra.mxu0 0.0
        %758 = vmatprep.subr.mxu0 0.0
        %759 = vmatpush1.msra.mxu0 0.0
        %760 = vmatprep.subr.mxu0 0.0
        %761 = vmatpush1.msra.mxu0 0.0
        %762 = vmatprep.subr.mxu0 0.0
        %763 = vmatpush1.msra.mxu0 0.0
        %764 = vmatprep.subr.mxu0 0.0
        %765 = vmatpush1.msra.mxu0 0.0
        %766 = vmatprep.subr.mxu0 0.0
        %767 = vmatpush1.msra.mxu0 0.0
        %768 = vmatprep.subr.mxu0 0.0
        %769 = vmatpush1.msra.mxu0 0.0
        %770 = vmatprep.subr.mxu0 0.0
        %771 = vmatpush1.msra.mxu0 0.0
        %772 = vmatprep.subr.mxu0 0.0
        %773 = vmatpush1.msra.mxu0 0.0
        %774 = vmatprep.subr.mxu0 0.0
        %775 = vmatpush1.msra.mxu0 0.0
        %776 = vmatprep.subr.mxu0 0.0
        %777 = vmatpush1.msra.mxu0 0.0
        %778 = vmatprep.subr.mxu0 0.0
        %779 = vmatpush1.msra.mxu0 0.0
        %780 = vmatprep.subr.mxu0 0.0
        %781 = vmatpush1.msra.mxu0 0.0
        %782 = vmatprep.subr.mxu0 0.0
        %783 = vmatpush1.msra.mxu0 0.0
        %784 = vmatprep.subr.mxu0 0.0
        %785 = vmatpush1.msra.mxu0 0.0
        %786 = vmatprep.subr.mxu0 0.0
        %787 = vmatpush1.msra.mxu0 0.0
        %788 = vmatprep.subr.mxu0 0.0
        %789 = vmatpush1.msra.mxu0 0.0
        %790 = vmatprep.subr.mxu0 0.0
        %791 = vmatpush1.msra.mxu0 0.0
        %792 = vmatprep.subr.mxu0 0.0
        %793 = vmatpush1.msra.mxu0 0.0
        %794 = vmatprep.mubr.f32.mxu0 0.0
        %795 = vmatmul.mubr.f32.gmra.mrb[0].mxu0 %v722
        %v796 = vpop.f32.mrb[0].mxu0
        %v797 = vadd.f32 0.0, %v796
        %v798 = vpop.f32.mrb[0].mxu0
        %v799 = vadd.f32 0.0, %v798
        %800 = vdwg.mxu0
        %801 = vmatprep.subr.mxu0 0.0
        %802 = vmatpush1.msra.mxu0 %v728
        %803 = vmatprep.subr.mxu0 0.0
        %804 = vmatpush1.msra.mxu0 0.0
        %805 = vmatprep.subr.mxu0 0.0
        %806 = vmatpush1.msra.mxu0 0.0
        %807 = vmatprep.subr.mxu0 0.0
        %808 = vmatpush1.msra.mxu0 0.0
        %809 = vmatprep.subr.mxu0 0.0
        %810 = vmatpush1.msra.mxu0 0.0
        %811 = vmatprep.subr.mxu0 0.0
        %812 = vmatpush1.msra.mxu0 0.0
        %813 = vmatprep.subr.mxu0 0.0
        %814 = vmatpush1.msra.mxu0 0.0
        %815 = vmatprep.subr.mxu0 0.0
        %816 = vmatpush1.msra.mxu0 0.0
        %817 = vmatprep.subr.mxu0 0.0
        %818 = vmatpush1.msra.mxu0 0.0
        %819 = vmatprep.subr.mxu0 0.0
        %820 = vmatpush1.msra.mxu0 0.0
        %821 = vmatprep.subr.mxu0 0.0
        %822 = vmatpush1.msra.mxu0 0.0
        %823 = vmatprep.subr.mxu0 0.0
        %824 = vmatpush1.msra.mxu0 0.0
        %825 = vmatprep.subr.mxu0 0.0
        %826 = vmatpush1.msra.mxu0 0.0
        %827 = vmatprep.subr.mxu0 0.0
        %828 = vmatpush1.msra.mxu0 0.0
        %829 = vmatprep.subr.mxu0 0.0
        %830 = vmatpush1.msra.mxu0 0.0
        %831 = vmatprep.subr.mxu0 0.0
        %832 = vmatpush1.msra.mxu0 0.0
        %833 = vmatprep.subr.mxu0 0.0
        %834 = vmatpush1.msra.mxu0 0.0
        %835 = vmatprep.subr.mxu0 0.0
        %836 = vmatpush1.msra.mxu0 0.0
        %837 = vmatprep.subr.mxu0 0.0
        %838 = vmatpush1.msra.mxu0 0.0
        %839 = vmatprep.subr.mxu0 0.0
        %840 = vmatpush1.msra.mxu0 0.0
        %841 = vmatprep.subr.mxu0 0.0
        %842 = vmatpush1.msra.mxu0 0.0
        %843 = vmatprep.subr.mxu0 0.0
        %844 = vmatpush1.msra.mxu0 0.0
        %845 = vmatprep.subr.mxu0 0.0
        %846 = vmatpush1.msra.mxu0 0.0
        %847 = vmatprep.subr.mxu0 0.0
        %848 = vmatpush1.msra.mxu0 0.0
        %849 = vmatprep.subr.mxu0 0.0
        %850 = vmatpush1.msra.mxu0 0.0
        %851 = vmatprep.subr.mxu0 0.0
        %852 = vmatpush1.msra.mxu0 0.0
        %853 = vmatprep.subr.mxu0 0.0
        %854 = vmatpush1.msra.mxu0 0.0
        %855 = vmatprep.subr.mxu0 0.0
        %856 = vmatpush1.msra.mxu0 0.0
        %857 = vmatprep.subr.mxu0 0.0
        %858 = vmatpush1.msra.mxu0 0.0
        %859 = vmatprep.subr.mxu0 0.0
        %860 = vmatpush1.msra.mxu0 0.0
        %861 = vmatprep.subr.mxu0 0.0
        %862 = vmatpush1.msra.mxu0 0.0
        %863 = vmatprep.subr.mxu0 0.0
        %864 = vmatpush1.msra.mxu0 0.0
        %865 = vmatprep.mubr.f32.mxu0 0.0
        %866 = vmatmul.mubr.f32.gmra.mrb[0].mxu0 %v722
        %v867 = vpop.f32.mrb[0].mxu0
        %v868 = vadd.f32 0.0, %v867
        %v869 = vpop.f32.mrb[0].mxu0
        %870 = vdwg.mxu0
        %v871 = vadd.f32 %v702, %v797
        %v872 = vadd.f32 %v703, %v799
        %v873 = vadd.f32 %v704, %v868
        %v874 = vld [vmem:[%s208] sm:$0xff]
        %v875 = vld [vmem:[%s208 + $0x8] sm:$0xf]
        %s876 = scalar_lea.vmem %s212, 32
        %v877 = vld [vmem:[%s876] sm:$0xff]
        %v880 = vcombine.high %v874, %v874
        %881 = vrot.lane.b32.xlu0 %v874, 109
        %v882 = vpop.permute.xlu0 %881
        %883 = vrot.lane.b32.xlu0 %v880, 109
        %v884 = vpop.permute.xlu0 %883
        %885 = vrot.lane.b32.xlu0 %v875, 109
        %v886 = vpop.permute.xlu0 %885
        %vm887 = vcmask 891904
        %v888 = vsel %vm887, %v882, %v884
        %v889 = vsel %vm887, %v884, %v886
        %v891 = vsel %vm234, %v877, 0
        %v893 = vsel %vm238, %v888, 0
        %v895 = vsel %vm238, %v889, 0
        %v897 = vsel %vm238, %v886, 0
        %899 = vmatprep.subr.mxu0 %v895
        %900 = vmatpush1.msra.mxu0 %v893
        %901 = vmatprep.subr.mxu0 0.0
        %902 = vmatpush1.msra.mxu0 0.0
        %903 = vmatprep.subr.mxu0 0.0
        %904 = vmatpush1.msra.mxu0 0.0
        %905 = vmatprep.subr.mxu0 0.0
        %906 = vmatpush1.msra.mxu0 0.0
        %907 = vmatprep.subr.mxu0 0.0
        %908 = vmatpush1.msra.mxu0 0.0
        %909 = vmatprep.subr.mxu0 0.0
        %910 = vmatpush1.msra.mxu0 0.0
        %911 = vmatprep.subr.mxu0 0.0
        %912 = vmatpush1.msra.mxu0 0.0
        %913 = vmatprep.subr.mxu0 0.0
        %914 = vmatpush1.msra.mxu0 0.0
        %915 = vmatprep.subr.mxu0 0.0
        %916 = vmatpush1.msra.mxu0 0.0
        %917 = vmatprep.subr.mxu0 0.0
        %918 = vmatpush1.msra.mxu0 0.0
        %919 = vmatprep.subr.mxu0 0.0
        %920 = vmatpush1.msra.mxu0 0.0
        %921 = vmatprep.subr.mxu0 0.0
        %922 = vmatpush1.msra.mxu0 0.0
        %923 = vmatprep.subr.mxu0 0.0
        %924 = vmatpush1.msra.mxu0 0.0
        %925 = vmatprep.subr.mxu0 0.0
        %926 = vmatpush1.msra.mxu0 0.0
        %927 = vmatprep.subr.mxu0 0.0
        %928 = vmatpush1.msra.mxu0 0.0
        %929 = vmatprep.subr.mxu0 0.0
        %930 = vmatpush1.msra.mxu0 0.0
        %931 = vmatprep.subr.mxu0 0.0
        %932 = vmatpush1.msra.mxu0 0.0
        %933 = vmatprep.subr.mxu0 0.0
        %934 = vmatpush1.msra.mxu0 0.0
        %935 = vmatprep.subr.mxu0 0.0
        %936 = vmatpush1.msra.mxu0 0.0
        %937 = vmatprep.subr.mxu0 0.0
        %938 = vmatpush1.msra.mxu0 0.0
        %939 = vmatprep.subr.mxu0 0.0
        %940 = vmatpush1.msra.mxu0 0.0
        %941 = vmatprep.subr.mxu0 0.0
        %942 = vmatpush1.msra.mxu0 0.0
        %943 = vmatprep.subr.mxu0 0.0
        %944 = vmatpush1.msra.mxu0 0.0
        %945 = vmatprep.subr.mxu0 0.0
        %946 = vmatpush1.msra.mxu0 0.0
        %947 = vmatprep.subr.mxu0 0.0
        %948 = vmatpush1.msra.mxu0 0.0
        %949 = vmatprep.subr.mxu0 0.0
        %950 = vmatpush1.msra.mxu0 0.0
        %951 = vmatprep.subr.mxu0 0.0
        %952 = vmatpush1.msra.mxu0 0.0
        %953 = vmatprep.subr.mxu0 0.0
        %954 = vmatpush1.msra.mxu0 0.0
        %955 = vmatprep.subr.mxu0 0.0
        %956 = vmatpush1.msra.mxu0 0.0
        %957 = vmatprep.subr.mxu0 0.0
        %958 = vmatpush1.msra.mxu0 0.0
        %959 = vmatprep.subr.mxu0 0.0
        %960 = vmatpush1.msra.mxu0 0.0
        %961 = vmatprep.subr.mxu0 0.0
        %962 = vmatpush1.msra.mxu0 0.0
        %963 = vmatprep.mubr.f32.mxu0 0.0
        %964 = vmatmul.mubr.f32.gmra.mrb[0].mxu0 %v891
        %v965 = vpop.f32.mrb[0].mxu0
        %v966 = vadd.f32 0.0, %v965
        %v967 = vpop.f32.mrb[0].mxu0
        %v968 = vadd.f32 0.0, %v967
        %969 = vdwg.mxu0
        %970 = vmatprep.subr.mxu0 0.0
        %971 = vmatpush1.msra.mxu0 %v897
        %972 = vmatprep.subr.mxu0 0.0
        %973 = vmatpush1.msra.mxu0 0.0
        %974 = vmatprep.subr.mxu0 0.0
        %975 = vmatpush1.msra.mxu0 0.0
        %976 = vmatprep.subr.mxu0 0.0
        %977 = vmatpush1.msra.mxu0 0.0
        %978 = vmatprep.subr.mxu0 0.0
        %979 = vmatpush1.msra.mxu0 0.0
        %980 = vmatprep.subr.mxu0 0.0
        %981 = vmatpush1.msra.mxu0 0.0
        %982 = vmatprep.subr.mxu0 0.0
        %983 = vmatpush1.msra.mxu0 0.0
        %984 = vmatprep.subr.mxu0 0.0
        %985 = vmatpush1.msra.mxu0 0.0
        %986 = vmatprep.subr.mxu0 0.0
        %987 = vmatpush1.msra.mxu0 0.0
        %988 = vmatprep.subr.mxu0 0.0
        %989 = vmatpush1.msra.mxu0 0.0
        %990 = vmatprep.subr.mxu0 0.0
        %991 = vmatpush1.msra.mxu0 0.0
        %992 = vmatprep.subr.mxu0 0.0
        %993 = vmatpush1.msra.mxu0 0.0
        %994 = vmatprep.subr.mxu0 0.0
        %995 = vmatpush1.msra.mxu0 0.0
        %996 = vmatprep.subr.mxu0 0.0
        %997 = vmatpush1.msra.mxu0 0.0
        %998 = vmatprep.subr.mxu0 0.0
        %999 = vmatpush1.msra.mxu0 0.0
        %1000 = vmatprep.subr.mxu0 0.0
        %1001 = vmatpush1.msra.mxu0 0.0
        %1002 = vmatprep.subr.mxu0 0.0
        %1003 = vmatpush1.msra.mxu0 0.0
        %1004 = vmatprep.subr.mxu0 0.0
        %1005 = vmatpush1.msra.mxu0 0.0
        %1006 = vmatprep.subr.mxu0 0.0
        %1007 = vmatpush1.msra.mxu0 0.0
        %1008 = vmatprep.subr.mxu0 0.0
        %1009 = vmatpush1.msra.mxu0 0.0
        %1010 = vmatprep.subr.mxu0 0.0
        %1011 = vmatpush1.msra.mxu0 0.0
        %1012 = vmatprep.subr.mxu0 0.0
        %1013 = vmatpush1.msra.mxu0 0.0
        %1014 = vmatprep.subr.mxu0 0.0
        %1015 = vmatpush1.msra.mxu0 0.0
        %1016 = vmatprep.subr.mxu0 0.0
        %1017 = vmatpush1.msra.mxu0 0.0
        %1018 = vmatprep.subr.mxu0 0.0
        %1019 = vmatpush1.msra.mxu0 0.0
        %1020 = vmatprep.subr.mxu0 0.0
        %1021 = vmatpush1.msra.mxu0 0.0
        %1022 = vmatprep.subr.mxu0 0.0
        %1023 = vmatpush1.msra.mxu0 0.0
        %1024 = vmatprep.subr.mxu0 0.0
        %1025 = vmatpush1.msra.mxu0 0.0
        %1026 = vmatprep.subr.mxu0 0.0
        %1027 = vmatpush1.msra.mxu0 0.0
        %1028 = vmatprep.subr.mxu0 0.0
        %1029 = vmatpush1.msra.mxu0 0.0
        %1030 = vmatprep.subr.mxu0 0.0
        %1031 = vmatpush1.msra.mxu0 0.0
        %1032 = vmatprep.subr.mxu0 0.0
        %1033 = vmatpush1.msra.mxu0 0.0
        %1034 = vmatprep.mubr.f32.mxu0 0.0
        %1035 = vmatmul.mubr.f32.gmra.mrb[0].mxu0 %v891
        %v1036 = vpop.f32.mrb[0].mxu0
        %v1037 = vadd.f32 0.0, %v1036
        %v1038 = vpop.f32.mrb[0].mxu0
        %1039 = vdwg.mxu0
        %v1040 = vadd.f32 %v871, %v966
        %v1041 = vadd.f32 %v872, %v968
        %v1042 = vadd.f32 %v873, %v1037
        %v1043 = vld [vmem:[%s208] sm:$0xff]
        %v1044 = vld [vmem:[%s208 + $0x8] sm:$0xf]
        %s1045 = scalar_lea.vmem %s212, 40
        %v1046 = vld [vmem:[%s1045] sm:$0xff]
        %v1049 = vcombine.high %v1043, %v1043
        %1050 = vrot.lane.b32.xlu0 %v1043, 108
        %v1051 = vpop.permute.xlu0 %1050
        %1052 = vrot.lane.b32.xlu0 %v1049, 108
        %v1053 = vpop.permute.xlu0 %1052
        %1054 = vrot.lane.b32.xlu0 %v1044, 108
        %v1055 = vpop.permute.xlu0 %1054
        %vm1056 = vcmask 883712
        %v1057 = vsel %vm1056, %v1051, %v1053
        %v1058 = vsel %vm1056, %v1053, %v1055
        %v1060 = vsel %vm234, %v1046, 0
        %v1062 = vsel %vm238, %v1057, 0
        %v1064 = vsel %vm238, %v1058, 0
        %v1066 = vsel %vm238, %v1055, 0
        %1068 = vmatprep.subr.mxu0 %v1064
        %1069 = vmatpush1.msra.mxu0 %v1062
        %1070 = vmatprep.subr.mxu0 0.0
        %1071 = vmatpush1.msra.mxu0 0.0
        %1072 = vmatprep.subr.mxu0 0.0
        %1073 = vmatpush1.msra.mxu0 0.0
        %1074 = vmatprep.subr.mxu0 0.0
        %1075 = vmatpush1.msra.mxu0 0.0
        %1076 = vmatprep.subr.mxu0 0.0
        %1077 = vmatpush1.msra.mxu0 0.0
        %1078 = vmatprep.subr.mxu0 0.0
        %1079 = vmatpush1.msra.mxu0 0.0
        %1080 = vmatprep.subr.mxu0 0.0
        %1081 = vmatpush1.msra.mxu0 0.0
        %1082 = vmatprep.subr.mxu0 0.0
        %1083 = vmatpush1.msra.mxu0 0.0
        %1084 = vmatprep.subr.mxu0 0.0
        %1085 = vmatpush1.msra.mxu0 0.0
        %1086 = vmatprep.subr.mxu0 0.0
        %1087 = vmatpush1.msra.mxu0 0.0
        %1088 = vmatprep.subr.mxu0 0.0
        %1089 = vmatpush1.msra.mxu0 0.0
        %1090 = vmatprep.subr.mxu0 0.0
        %1091 = vmatpush1.msra.mxu0 0.0
        %1092 = vmatprep.subr.mxu0 0.0
        %1093 = vmatpush1.msra.mxu0 0.0
        %1094 = vmatprep.subr.mxu0 0.0
        %1095 = vmatpush1.msra.mxu0 0.0
        %1096 = vmatprep.subr.mxu0 0.0
        %1097 = vmatpush1.msra.mxu0 0.0
        %1098 = vmatprep.subr.mxu0 0.0
        %1099 = vmatpush1.msra.mxu0 0.0
        %1100 = vmatprep.subr.mxu0 0.0
        %1101 = vmatpush1.msra.mxu0 0.0
        %1102 = vmatprep.subr.mxu0 0.0
        %1103 = vmatpush1.msra.mxu0 0.0
        %1104 = vmatprep.subr.mxu0 0.0
        %1105 = vmatpush1.msra.mxu0 0.0
        %1106 = vmatprep.subr.mxu0 0.0
        %1107 = vmatpush1.msra.mxu0 0.0
        %1108 = vmatprep.subr.mxu0 0.0
        %1109 = vmatpush1.msra.mxu0 0.0
        %1110 = vmatprep.subr.mxu0 0.0
        %1111 = vmatpush1.msra.mxu0 0.0
        %1112 = vmatprep.subr.mxu0 0.0
        %1113 = vmatpush1.msra.mxu0 0.0
        %1114 = vmatprep.subr.mxu0 0.0
        %1115 = vmatpush1.msra.mxu0 0.0
        %1116 = vmatprep.subr.mxu0 0.0
        %1117 = vmatpush1.msra.mxu0 0.0
        %1118 = vmatprep.subr.mxu0 0.0
        %1119 = vmatpush1.msra.mxu0 0.0
        %1120 = vmatprep.subr.mxu0 0.0
        %1121 = vmatpush1.msra.mxu0 0.0
        %1122 = vmatprep.subr.mxu0 0.0
        %1123 = vmatpush1.msra.mxu0 0.0
        %1124 = vmatprep.subr.mxu0 0.0
        %1125 = vmatpush1.msra.mxu0 0.0
        %1126 = vmatprep.subr.mxu0 0.0
        %1127 = vmatpush1.msra.mxu0 0.0
        %1128 = vmatprep.subr.mxu0 0.0
        %1129 = vmatpush1.msra.mxu0 0.0
        %1130 = vmatprep.subr.mxu0 0.0
        %1131 = vmatpush1.msra.mxu0 0.0
        %1132 = vmatprep.mubr.f32.mxu0 0.0
        %1133 = vmatmul.mubr.f32.gmra.mrb[0].mxu0 %v1060
        %v1134 = vpop.f32.mrb[0].mxu0
        %v1135 = vadd.f32 0.0, %v1134
        %v1136 = vpop.f32.mrb[0].mxu0
        %v1137 = vadd.f32 0.0, %v1136
        %1138 = vdwg.mxu0
        %1139 = vmatprep.subr.mxu0 0.0
        %1140 = vmatpush1.msra.mxu0 %v1066
        %1141 = vmatprep.subr.mxu0 0.0
        %1142 = vmatpush1.msra.mxu0 0.0
        %1143 = vmatprep.subr.mxu0 0.0
        %1144 = vmatpush1.msra.mxu0 0.0
        %1145 = vmatprep.subr.mxu0 0.0
        %1146 = vmatpush1.msra.mxu0 0.0
        %1147 = vmatprep.subr.mxu0 0.0
        %1148 = vmatpush1.msra.mxu0 0.0
        %1149 = vmatprep.subr.mxu0 0.0
        %1150 = vmatpush1.msra.mxu0 0.0
        %1151 = vmatprep.subr.mxu0 0.0
        %1152 = vmatpush1.msra.mxu0 0.0
        %1153 = vmatprep.subr.mxu0 0.0
        %1154 = vmatpush1.msra.mxu0 0.0
        %1155 = vmatprep.subr.mxu0 0.0
        %1156 = vmatpush1.msra.mxu0 0.0
        %1157 = vmatprep.subr.mxu0 0.0
        %1158 = vmatpush1.msra.mxu0 0.0
        %1159 = vmatprep.subr.mxu0 0.0
        %1160 = vmatpush1.msra.mxu0 0.0
        %1161 = vmatprep.subr.mxu0 0.0
        %1162 = vmatpush1.msra.mxu0 0.0
        %1163 = vmatprep.subr.mxu0 0.0
        %1164 = vmatpush1.msra.mxu0 0.0
        %1165 = vmatprep.subr.mxu0 0.0
        %1166 = vmatpush1.msra.mxu0 0.0
        %1167 = vmatprep.subr.mxu0 0.0
        %1168 = vmatpush1.msra.mxu0 0.0
        %1169 = vmatprep.subr.mxu0 0.0
        %1170 = vmatpush1.msra.mxu0 0.0
        %1171 = vmatprep.subr.mxu0 0.0
        %1172 = vmatpush1.msra.mxu0 0.0
        %1173 = vmatprep.subr.mxu0 0.0
        %1174 = vmatpush1.msra.mxu0 0.0
        %1175 = vmatprep.subr.mxu0 0.0
        %1176 = vmatpush1.msra.mxu0 0.0
        %1177 = vmatprep.subr.mxu0 0.0
        %1178 = vmatpush1.msra.mxu0 0.0
        %1179 = vmatprep.subr.mxu0 0.0
        %1180 = vmatpush1.msra.mxu0 0.0
        %1181 = vmatprep.subr.mxu0 0.0
        %1182 = vmatpush1.msra.mxu0 0.0
        %1183 = vmatprep.subr.mxu0 0.0
        %1184 = vmatpush1.msra.mxu0 0.0
        %1185 = vmatprep.subr.mxu0 0.0
        %1186 = vmatpush1.msra.mxu0 0.0
        %1187 = vmatprep.subr.mxu0 0.0
        %1188 = vmatpush1.msra.mxu0 0.0
        %1189 = vmatprep.subr.mxu0 0.0
        %1190 = vmatpush1.msra.mxu0 0.0
        %1191 = vmatprep.subr.mxu0 0.0
        %1192 = vmatpush1.msra.mxu0 0.0
        %1193 = vmatprep.subr.mxu0 0.0
        %1194 = vmatpush1.msra.mxu0 0.0
        %1195 = vmatprep.subr.mxu0 0.0
        %1196 = vmatpush1.msra.mxu0 0.0
        %1197 = vmatprep.subr.mxu0 0.0
        %1198 = vmatpush1.msra.mxu0 0.0
        %1199 = vmatprep.subr.mxu0 0.0
        %1200 = vmatpush1.msra.mxu0 0.0
        %1201 = vmatprep.subr.mxu0 0.0
        %1202 = vmatpush1.msra.mxu0 0.0
        %1203 = vmatprep.mubr.f32.mxu0 0.0
        %1204 = vmatmul.mubr.f32.gmra.mrb[0].mxu0 %v1060
        %v1205 = vpop.f32.mrb[0].mxu0
        %v1206 = vadd.f32 0.0, %v1205
        %v1207 = vpop.f32.mrb[0].mxu0
        %1208 = vdwg.mxu0
        %v1209 = vadd.f32 %v1040, %v1135
        %v1210 = vadd.f32 %v1041, %v1137
        %v1211 = vadd.f32 %v1042, %v1206
        %v1212 = vld [vmem:[%s208] sm:$0xff]
        %v1213 = vld [vmem:[%s208 + $0x8] sm:$0xf]
        %s1214 = scalar_lea.vmem %s212, 48
        %v1215 = vld [vmem:[%s1214] sm:$0xff]
        %v1218 = vcombine.high %v1212, %v1212
        %1219 = vrot.lane.b32.xlu0 %v1212, 92
        %v1220 = vpop.permute.xlu0 %1219
        %1221 = vrot.lane.b32.xlu0 %v1218, 92
        %v1222 = vpop.permute.xlu0 %1221
        %1223 = vrot.lane.b32.xlu0 %v1213, 92
        %v1224 = vpop.permute.xlu0 %1223
        %vm1225 = vcmask 752640
        %v1226 = vsel %vm1225, %v1220, %v1222
        %v1227 = vsel %vm1225, %v1222, %v1224
        %v1229 = vsel %vm234, %v1215, 0
        %v1231 = vsel %vm238, %v1226, 0
        %v1233 = vsel %vm238, %v1227, 0
        %v1235 = vsel %vm238, %v1224, 0
        %1237 = vmatprep.subr.mxu0 %v1233
        %1238 = vmatpush1.msra.mxu0 %v1231
        %1239 = vmatprep.subr.mxu0 0.0
        %1240 = vmatpush1.msra.mxu0 0.0
        %1241 = vmatprep.subr.mxu0 0.0
        %1242 = vmatpush1.msra.mxu0 0.0
        %1243 = vmatprep.subr.mxu0 0.0
        %1244 = vmatpush1.msra.mxu0 0.0
        %1245 = vmatprep.subr.mxu0 0.0
        %1246 = vmatpush1.msra.mxu0 0.0
        %1247 = vmatprep.subr.mxu0 0.0
        %1248 = vmatpush1.msra.mxu0 0.0
        %1249 = vmatprep.subr.mxu0 0.0
        %1250 = vmatpush1.msra.mxu0 0.0
        %1251 = vmatprep.subr.mxu0 0.0
        %1252 = vmatpush1.msra.mxu0 0.0
        %1253 = vmatprep.subr.mxu0 0.0
        %1254 = vmatpush1.msra.mxu0 0.0
        %1255 = vmatprep.subr.mxu0 0.0
        %1256 = vmatpush1.msra.mxu0 0.0
        %1257 = vmatprep.subr.mxu0 0.0
        %1258 = vmatpush1.msra.mxu0 0.0
        %1259 = vmatprep.subr.mxu0 0.0
        %1260 = vmatpush1.msra.mxu0 0.0
        %1261 = vmatprep.subr.mxu0 0.0
        %1262 = vmatpush1.msra.mxu0 0.0
        %1263 = vmatprep.subr.mxu0 0.0
        %1264 = vmatpush1.msra.mxu0 0.0
        %1265 = vmatprep.subr.mxu0 0.0
        %1266 = vmatpush1.msra.mxu0 0.0
        %1267 = vmatprep.subr.mxu0 0.0
        %1268 = vmatpush1.msra.mxu0 0.0
        %1269 = vmatprep.subr.mxu0 0.0
        %1270 = vmatpush1.msra.mxu0 0.0
        %1271 = vmatprep.subr.mxu0 0.0
        %1272 = vmatpush1.msra.mxu0 0.0
        %1273 = vmatprep.subr.mxu0 0.0
        %1274 = vmatpush1.msra.mxu0 0.0
        %1275 = vmatprep.subr.mxu0 0.0
        %1276 = vmatpush1.msra.mxu0 0.0
        %1277 = vmatprep.subr.mxu0 0.0
        %1278 = vmatpush1.msra.mxu0 0.0
        %1279 = vmatprep.subr.mxu0 0.0
        %1280 = vmatpush1.msra.mxu0 0.0
        %1281 = vmatprep.subr.mxu0 0.0
        %1282 = vmatpush1.msra.mxu0 0.0
        %1283 = vmatprep.subr.mxu0 0.0
        %1284 = vmatpush1.msra.mxu0 0.0
        %1285 = vmatprep.subr.mxu0 0.0
        %1286 = vmatpush1.msra.mxu0 0.0
        %1287 = vmatprep.subr.mxu0 0.0
        %1288 = vmatpush1.msra.mxu0 0.0
        %1289 = vmatprep.subr.mxu0 0.0
        %1290 = vmatpush1.msra.mxu0 0.0
        %1291 = vmatprep.subr.mxu0 0.0
        %1292 = vmatpush1.msra.mxu0 0.0
        %1293 = vmatprep.subr.mxu0 0.0
        %1294 = vmatpush1.msra.mxu0 0.0
        %1295 = vmatprep.subr.mxu0 0.0
        %1296 = vmatpush1.msra.mxu0 0.0
        %1297 = vmatprep.subr.mxu0 0.0
        %1298 = vmatpush1.msra.mxu0 0.0
        %1299 = vmatprep.subr.mxu0 0.0
        %1300 = vmatpush1.msra.mxu0 0.0
        %1301 = vmatprep.mubr.f32.mxu0 0.0
        %1302 = vmatmul.mubr.f32.gmra.mrb[0].mxu0 %v1229
        %v1303 = vpop.f32.mrb[0].mxu0
        %v1304 = vadd.f32 0.0, %v1303
        %v1305 = vpop.f32.mrb[0].mxu0
        %v1306 = vadd.f32 0.0, %v1305
        %1307 = vdwg.mxu0
        %1308 = vmatprep.subr.mxu0 0.0
        %1309 = vmatpush1.msra.mxu0 %v1235
        %1310 = vmatprep.subr.mxu0 0.0
        %1311 = vmatpush1.msra.mxu0 0.0
        %1312 = vmatprep.subr.mxu0 0.0
        %1313 = vmatpush1.msra.mxu0 0.0
        %1314 = vmatprep.subr.mxu0 0.0
        %1315 = vmatpush1.msra.mxu0 0.0
        %1316 = vmatprep.subr.mxu0 0.0
        %1317 = vmatpush1.msra.mxu0 0.0
        %1318 = vmatprep.subr.mxu0 0.0
        %1319 = vmatpush1.msra.mxu0 0.0
        %1320 = vmatprep.subr.mxu0 0.0
        %1321 = vmatpush1.msra.mxu0 0.0
        %1322 = vmatprep.subr.mxu0 0.0
        %1323 = vmatpush1.msra.mxu0 0.0
        %1324 = vmatprep.subr.mxu0 0.0
        %1325 = vmatpush1.msra.mxu0 0.0
        %1326 = vmatprep.subr.mxu0 0.0
        %1327 = vmatpush1.msra.mxu0 0.0
        %1328 = vmatprep.subr.mxu0 0.0
        %1329 = vmatpush1.msra.mxu0 0.0
        %1330 = vmatprep.subr.mxu0 0.0
        %1331 = vmatpush1.msra.mxu0 0.0
        %1332 = vmatprep.subr.mxu0 0.0
        %1333 = vmatpush1.msra.mxu0 0.0
        %1334 = vmatprep.subr.mxu0 0.0
        %1335 = vmatpush1.msra.mxu0 0.0
        %1336 = vmatprep.subr.mxu0 0.0
        %1337 = vmatpush1.msra.mxu0 0.0
        %1338 = vmatprep.subr.mxu0 0.0
        %1339 = vmatpush1.msra.mxu0 0.0
        %1340 = vmatprep.subr.mxu0 0.0
        %1341 = vmatpush1.msra.mxu0 0.0
        %1342 = vmatprep.subr.mxu0 0.0
        %1343 = vmatpush1.msra.mxu0 0.0
        %1344 = vmatprep.subr.mxu0 0.0
        %1345 = vmatpush1.msra.mxu0 0.0
        %1346 = vmatprep.subr.mxu0 0.0
        %1347 = vmatpush1.msra.mxu0 0.0
        %1348 = vmatprep.subr.mxu0 0.0
        %1349 = vmatpush1.msra.mxu0 0.0
        %1350 = vmatprep.subr.mxu0 0.0
        %1351 = vmatpush1.msra.mxu0 0.0
        %1352 = vmatprep.subr.mxu0 0.0
        %1353 = vmatpush1.msra.mxu0 0.0
        %1354 = vmatprep.subr.mxu0 0.0
        %1355 = vmatpush1.msra.mxu0 0.0
        %1356 = vmatprep.subr.mxu0 0.0
        %1357 = vmatpush1.msra.mxu0 0.0
        %1358 = vmatprep.subr.mxu0 0.0
        %1359 = vmatpush1.msra.mxu0 0.0
        %1360 = vmatprep.subr.mxu0 0.0
        %1361 = vmatpush1.msra.mxu0 0.0
        %1362 = vmatprep.subr.mxu0 0.0
        %1363 = vmatpush1.msra.mxu0 0.0
        %1364 = vmatprep.subr.mxu0 0.0
        %1365 = vmatpush1.msra.mxu0 0.0
        %1366 = vmatprep.subr.mxu0 0.0
        %1367 = vmatpush1.msra.mxu0 0.0
        %1368 = vmatprep.subr.mxu0 0.0
        %1369 = vmatpush1.msra.mxu0 0.0
        %1370 = vmatprep.subr.mxu0 0.0
        %1371 = vmatpush1.msra.mxu0 0.0
        %1372 = vmatprep.mubr.f32.mxu0 0.0
        %1373 = vmatmul.mubr.f32.gmra.mrb[0].mxu0 %v1229
        %v1374 = vpop.f32.mrb[0].mxu0
        %v1375 = vadd.f32 0.0, %v1374
        %v1376 = vpop.f32.mrb[0].mxu0
        %1377 = vdwg.mxu0
        %v1378 = vadd.f32 %v1209, %v1304
        %v1379 = vadd.f32 %v1210, %v1306
        %v1380 = vadd.f32 %v1211, %v1375
        %v1381 = vld [vmem:[%s208] sm:$0xff]
        %v1382 = vld [vmem:[%s208 + $0x8] sm:$0xf]
        %s1383 = scalar_lea.vmem %s212, 56
        %v1384 = vld [vmem:[%s1383] sm:$0xff]
        %v1387 = vcombine.high %v1381, %v1381
        %1388 = vrot.lane.b32.xlu0 %v1381, 91
        %v1389 = vpop.permute.xlu0 %1388
        %1390 = vrot.lane.b32.xlu0 %v1387, 91
        %v1391 = vpop.permute.xlu0 %1390
        %1392 = vrot.lane.b32.xlu0 %v1382, 91
        %v1393 = vpop.permute.xlu0 %1392
        %vm1394 = vcmask 744448
        %v1395 = vsel %vm1394, %v1389, %v1391
        %v1396 = vsel %vm1394, %v1391, %v1393
        %v1398 = vsel %vm234, %v1384, 0
        %v1400 = vsel %vm238, %v1395, 0
        %v1402 = vsel %vm238, %v1396, 0
        %v1404 = vsel %vm238, %v1393, 0
        %1406 = vmatprep.subr.mxu0 %v1402
        %1407 = vmatpush1.msra.mxu0 %v1400
        %1408 = vmatprep.subr.mxu0 0.0
        %1409 = vmatpush1.msra.mxu0 0.0
        %1410 = vmatprep.subr.mxu0 0.0
        %1411 = vmatpush1.msra.mxu0 0.0
        %1412 = vmatprep.subr.mxu0 0.0
        %1413 = vmatpush1.msra.mxu0 0.0
        %1414 = vmatprep.subr.mxu0 0.0
        %1415 = vmatpush1.msra.mxu0 0.0
        %1416 = vmatprep.subr.mxu0 0.0
        %1417 = vmatpush1.msra.mxu0 0.0
        %1418 = vmatprep.subr.mxu0 0.0
        %1419 = vmatpush1.msra.mxu0 0.0
        %1420 = vmatprep.subr.mxu0 0.0
        %1421 = vmatpush1.msra.mxu0 0.0
        %1422 = vmatprep.subr.mxu0 0.0
        %1423 = vmatpush1.msra.mxu0 0.0
        %1424 = vmatprep.subr.mxu0 0.0
        %1425 = vmatpush1.msra.mxu0 0.0
        %1426 = vmatprep.subr.mxu0 0.0
        %1427 = vmatpush1.msra.mxu0 0.0
        %1428 = vmatprep.subr.mxu0 0.0
        %1429 = vmatpush1.msra.mxu0 0.0
        %1430 = vmatprep.subr.mxu0 0.0
        %1431 = vmatpush1.msra.mxu0 0.0
        %1432 = vmatprep.subr.mxu0 0.0
        %1433 = vmatpush1.msra.mxu0 0.0
        %1434 = vmatprep.subr.mxu0 0.0
        %1435 = vmatpush1.msra.mxu0 0.0
        %1436 = vmatprep.subr.mxu0 0.0
        %1437 = vmatpush1.msra.mxu0 0.0
        %1438 = vmatprep.subr.mxu0 0.0
        %1439 = vmatpush1.msra.mxu0 0.0
        %1440 = vmatprep.subr.mxu0 0.0
        %1441 = vmatpush1.msra.mxu0 0.0
        %1442 = vmatprep.subr.mxu0 0.0
        %1443 = vmatpush1.msra.mxu0 0.0
        %1444 = vmatprep.subr.mxu0 0.0
        %1445 = vmatpush1.msra.mxu0 0.0
        %1446 = vmatprep.subr.mxu0 0.0
        %1447 = vmatpush1.msra.mxu0 0.0
        %1448 = vmatprep.subr.mxu0 0.0
        %1449 = vmatpush1.msra.mxu0 0.0
        %1450 = vmatprep.subr.mxu0 0.0
        %1451 = vmatpush1.msra.mxu0 0.0
        %1452 = vmatprep.subr.mxu0 0.0
        %1453 = vmatpush1.msra.mxu0 0.0
        %1454 = vmatprep.subr.mxu0 0.0
        %1455 = vmatpush1.msra.mxu0 0.0
        %1456 = vmatprep.subr.mxu0 0.0
        %1457 = vmatpush1.msra.mxu0 0.0
        %1458 = vmatprep.subr.mxu0 0.0
        %1459 = vmatpush1.msra.mxu0 0.0
        %1460 = vmatprep.subr.mxu0 0.0
        %1461 = vmatpush1.msra.mxu0 0.0
        %1462 = vmatprep.subr.mxu0 0.0
        %1463 = vmatpush1.msra.mxu0 0.0
        %1464 = vmatprep.subr.mxu0 0.0
        %1465 = vmatpush1.msra.mxu0 0.0
        %1466 = vmatprep.subr.mxu0 0.0
        %1467 = vmatpush1.msra.mxu0 0.0
        %1468 = vmatprep.subr.mxu0 0.0
        %1469 = vmatpush1.msra.mxu0 0.0
        %1470 = vmatprep.mubr.f32.mxu0 0.0
        %1471 = vmatmul.mubr.f32.gmra.mrb[0].mxu0 %v1398
        %v1472 = vpop.f32.mrb[0].mxu0
        %v1473 = vadd.f32 0.0, %v1472
        %v1474 = vpop.f32.mrb[0].mxu0
        %v1475 = vadd.f32 0.0, %v1474
        %1476 = vdwg.mxu0
        %1477 = vmatprep.subr.mxu0 0.0
        %1478 = vmatpush1.msra.mxu0 %v1404
        %1479 = vmatprep.subr.mxu0 0.0
        %1480 = vmatpush1.msra.mxu0 0.0
        %1481 = vmatprep.subr.mxu0 0.0
        %1482 = vmatpush1.msra.mxu0 0.0
        %1483 = vmatprep.subr.mxu0 0.0
        %1484 = vmatpush1.msra.mxu0 0.0
        %1485 = vmatprep.subr.mxu0 0.0
        %1486 = vmatpush1.msra.mxu0 0.0
        %1487 = vmatprep.subr.mxu0 0.0
        %1488 = vmatpush1.msra.mxu0 0.0
        %1489 = vmatprep.subr.mxu0 0.0
        %1490 = vmatpush1.msra.mxu0 0.0
        %1491 = vmatprep.subr.mxu0 0.0
        %1492 = vmatpush1.msra.mxu0 0.0
        %1493 = vmatprep.subr.mxu0 0.0
        %1494 = vmatpush1.msra.mxu0 0.0
        %1495 = vmatprep.subr.mxu0 0.0
        %1496 = vmatpush1.msra.mxu0 0.0
        %1497 = vmatprep.subr.mxu0 0.0
        %1498 = vmatpush1.msra.mxu0 0.0
        %1499 = vmatprep.subr.mxu0 0.0
        %1500 = vmatpush1.msra.mxu0 0.0
        %1501 = vmatprep.subr.mxu0 0.0
        %1502 = vmatpush1.msra.mxu0 0.0
        %1503 = vmatprep.subr.mxu0 0.0
        %1504 = vmatpush1.msra.mxu0 0.0
        %1505 = vmatprep.subr.mxu0 0.0
        %1506 = vmatpush1.msra.mxu0 0.0
        %1507 = vmatprep.subr.mxu0 0.0
        %1508 = vmatpush1.msra.mxu0 0.0
        %1509 = vmatprep.subr.mxu0 0.0
        %1510 = vmatpush1.msra.mxu0 0.0
        %1511 = vmatprep.subr.mxu0 0.0
        %1512 = vmatpush1.msra.mxu0 0.0
        %1513 = vmatprep.subr.mxu0 0.0
        %1514 = vmatpush1.msra.mxu0 0.0
        %1515 = vmatprep.subr.mxu0 0.0
        %1516 = vmatpush1.msra.mxu0 0.0
        %1517 = vmatprep.subr.mxu0 0.0
        %1518 = vmatpush1.msra.mxu0 0.0
        %1519 = vmatprep.subr.mxu0 0.0
        %1520 = vmatpush1.msra.mxu0 0.0
        %1521 = vmatprep.subr.mxu0 0.0
        %1522 = vmatpush1.msra.mxu0 0.0
        %1523 = vmatprep.subr.mxu0 0.0
        %1524 = vmatpush1.msra.mxu0 0.0
        %1525 = vmatprep.subr.mxu0 0.0
        %1526 = vmatpush1.msra.mxu0 0.0
        %1527 = vmatprep.subr.mxu0 0.0
        %1528 = vmatpush1.msra.mxu0 0.0
        %1529 = vmatprep.subr.mxu0 0.0
        %1530 = vmatpush1.msra.mxu0 0.0
        %1531 = vmatprep.subr.mxu0 0.0
        %1532 = vmatpush1.msra.mxu0 0.0
        %1533 = vmatprep.subr.mxu0 0.0
        %1534 = vmatpush1.msra.mxu0 0.0
        %1535 = vmatprep.subr.mxu0 0.0
        %1536 = vmatpush1.msra.mxu0 0.0
        %1537 = vmatprep.subr.mxu0 0.0
        %1538 = vmatpush1.msra.mxu0 0.0
        %1539 = vmatprep.subr.mxu0 0.0
        %1540 = vmatpush1.msra.mxu0 0.0
        %1541 = vmatprep.mubr.f32.mxu0 0.0
        %1542 = vmatmul.mubr.f32.gmra.mrb[0].mxu0 %v1398
        %v1543 = vpop.f32.mrb[0].mxu0
        %v1544 = vadd.f32 0.0, %v1543
        %v1545 = vpop.f32.mrb[0].mxu0
        %1546 = vdwg.mxu0
        %v1547 = vadd.f32 %v1378, %v1473
        %v1548 = vadd.f32 %v1379, %v1475
        %v1549 = vadd.f32 %v1380, %v1544
        %v1550 = vld [vmem:[%s208] sm:$0xff]
        %v1551 = vld [vmem:[%s208 + $0x8] sm:$0xf]
        %s1552 = scalar_lea.vmem %s212, 64
        %v1553 = vld [vmem:[%s1552] sm:$0xff]
        %v1556 = vcombine.high %v1550, %v1550
        %1557 = vrot.lane.b32.xlu0 %v1550, 90
        %v1558 = vpop.permute.xlu0 %1557
        %1559 = vrot.lane.b32.xlu0 %v1556, 90
        %v1560 = vpop.permute.xlu0 %1559
        %1561 = vrot.lane.b32.xlu0 %v1551, 90
        %v1562 = vpop.permute.xlu0 %1561
        %vm1563 = vcmask 736256
        %v1564 = vsel %vm1563, %v1558, %v1560
        %v1565 = vsel %vm1563, %v1560, %v1562
        %v1567 = vsel %vm234, %v1553, 0
        %v1569 = vsel %vm238, %v1564, 0
        %v1571 = vsel %vm238, %v1565, 0
        %v1573 = vsel %vm238, %v1562, 0
        %1575 = vmatprep.subr.mxu0 %v1571
        %1576 = vmatpush1.msra.mxu0 %v1569
        %1577 = vmatprep.subr.mxu0 0.0
        %1578 = vmatpush1.msra.mxu0 0.0
        %1579 = vmatprep.subr.mxu0 0.0
        %1580 = vmatpush1.msra.mxu0 0.0
        %1581 = vmatprep.subr.mxu0 0.0
        %1582 = vmatpush1.msra.mxu0 0.0
        %1583 = vmatprep.subr.mxu0 0.0
        %1584 = vmatpush1.msra.mxu0 0.0
        %1585 = vmatprep.subr.mxu0 0.0
        %1586 = vmatpush1.msra.mxu0 0.0
        %1587 = vmatprep.subr.mxu0 0.0
        %1588 = vmatpush1.msra.mxu0 0.0
        %1589 = vmatprep.subr.mxu0 0.0
        %1590 = vmatpush1.msra.mxu0 0.0
        %1591 = vmatprep.subr.mxu0 0.0
        %1592 = vmatpush1.msra.mxu0 0.0
        %1593 = vmatprep.subr.mxu0 0.0
        %1594 = vmatpush1.msra.mxu0 0.0
        %1595 = vmatprep.subr.mxu0 0.0
        %1596 = vmatpush1.msra.mxu0 0.0
        %1597 = vmatprep.subr.mxu0 0.0
        %1598 = vmatpush1.msra.mxu0 0.0
        %1599 = vmatprep.subr.mxu0 0.0
        %1600 = vmatpush1.msra.mxu0 0.0
        %1601 = vmatprep.subr.mxu0 0.0
        %1602 = vmatpush1.msra.mxu0 0.0
        %1603 = vmatprep.subr.mxu0 0.0
        %1604 = vmatpush1.msra.mxu0 0.0
        %1605 = vmatprep.subr.mxu0 0.0
        %1606 = vmatpush1.msra.mxu0 0.0
        %1607 = vmatprep.subr.mxu0 0.0
        %1608 = vmatpush1.msra.mxu0 0.0
        %1609 = vmatprep.subr.mxu0 0.0
        %1610 = vmatpush1.msra.mxu0 0.0
        %1611 = vmatprep.subr.mxu0 0.0
        %1612 = vmatpush1.msra.mxu0 0.0
        %1613 = vmatprep.subr.mxu0 0.0
        %1614 = vmatpush1.msra.mxu0 0.0
        %1615 = vmatprep.subr.mxu0 0.0
        %1616 = vmatpush1.msra.mxu0 0.0
        %1617 = vmatprep.subr.mxu0 0.0
        %1618 = vmatpush1.msra.mxu0 0.0
        %1619 = vmatprep.subr.mxu0 0.0
        %1620 = vmatpush1.msra.mxu0 0.0
        %1621 = vmatprep.subr.mxu0 0.0
        %1622 = vmatpush1.msra.mxu0 0.0
        %1623 = vmatprep.subr.mxu0 0.0
        %1624 = vmatpush1.msra.mxu0 0.0
        %1625 = vmatprep.subr.mxu0 0.0
        %1626 = vmatpush1.msra.mxu0 0.0
        %1627 = vmatprep.subr.mxu0 0.0
        %1628 = vmatpush1.msra.mxu0 0.0
        %1629 = vmatprep.subr.mxu0 0.0
        %1630 = vmatpush1.msra.mxu0 0.0
        %1631 = vmatprep.subr.mxu0 0.0
        %1632 = vmatpush1.msra.mxu0 0.0
        %1633 = vmatprep.subr.mxu0 0.0
        %1634 = vmatpush1.msra.mxu0 0.0
        %1635 = vmatprep.subr.mxu0 0.0
        %1636 = vmatpush1.msra.mxu0 0.0
        %1637 = vmatprep.subr.mxu0 0.0
        %1638 = vmatpush1.msra.mxu0 0.0
        %1639 = vmatprep.mubr.f32.mxu0 0.0
        %1640 = vmatmul.mubr.f32.gmra.mrb[0].mxu0 %v1567
        %v1641 = vpop.f32.mrb[0].mxu0
        %v1642 = vadd.f32 0.0, %v1641
        %v1643 = vpop.f32.mrb[0].mxu0
        %v1644 = vadd.f32 0.0, %v1643
        %1645 = vdwg.mxu0
        %1646 = vmatprep.subr.mxu0 0.0
        %1647 = vmatpush1.msra.mxu0 %v1573
        %1648 = vmatprep.subr.mxu0 0.0
        %1649 = vmatpush1.msra.mxu0 0.0
        %1650 = vmatprep.subr.mxu0 0.0
        %1651 = vmatpush1.msra.mxu0 0.0
        %1652 = vmatprep.subr.mxu0 0.0
        %1653 = vmatpush1.msra.mxu0 0.0
        %1654 = vmatprep.subr.mxu0 0.0
        %1655 = vmatpush1.msra.mxu0 0.0
        %1656 = vmatprep.subr.mxu0 0.0
        %1657 = vmatpush1.msra.mxu0 0.0
        %1658 = vmatprep.subr.mxu0 0.0
        %1659 = vmatpush1.msra.mxu0 0.0
        %1660 = vmatprep.subr.mxu0 0.0
        %1661 = vmatpush1.msra.mxu0 0.0
        %1662 = vmatprep.subr.mxu0 0.0
        %1663 = vmatpush1.msra.mxu0 0.0
        %1664 = vmatprep.subr.mxu0 0.0
        %1665 = vmatpush1.msra.mxu0 0.0
        %1666 = vmatprep.subr.mxu0 0.0
        %1667 = vmatpush1.msra.mxu0 0.0
        %1668 = vmatprep.subr.mxu0 0.0
        %1669 = vmatpush1.msra.mxu0 0.0
        %1670 = vmatprep.subr.mxu0 0.0
        %1671 = vmatpush1.msra.mxu0 0.0
        %1672 = vmatprep.subr.mxu0 0.0
        %1673 = vmatpush1.msra.mxu0 0.0
        %1674 = vmatprep.subr.mxu0 0.0
        %1675 = vmatpush1.msra.mxu0 0.0
        %1676 = vmatprep.subr.mxu0 0.0
        %1677 = vmatpush1.msra.mxu0 0.0
        %1678 = vmatprep.subr.mxu0 0.0
        %1679 = vmatpush1.msra.mxu0 0.0
        %1680 = vmatprep.subr.mxu0 0.0
        %1681 = vmatpush1.msra.mxu0 0.0
        %1682 = vmatprep.subr.mxu0 0.0
        %1683 = vmatpush1.msra.mxu0 0.0
        %1684 = vmatprep.subr.mxu0 0.0
        %1685 = vmatpush1.msra.mxu0 0.0
        %1686 = vmatprep.subr.mxu0 0.0
        %1687 = vmatpush1.msra.mxu0 0.0
        %1688 = vmatprep.subr.mxu0 0.0
        %1689 = vmatpush1.msra.mxu0 0.0
        %1690 = vmatprep.subr.mxu0 0.0
        %1691 = vmatpush1.msra.mxu0 0.0
        %1692 = vmatprep.subr.mxu0 0.0
        %1693 = vmatpush1.msra.mxu0 0.0
        %1694 = vmatprep.subr.mxu0 0.0
        %1695 = vmatpush1.msra.mxu0 0.0
        %1696 = vmatprep.subr.mxu0 0.0
        %1697 = vmatpush1.msra.mxu0 0.0
        %1698 = vmatprep.subr.mxu0 0.0
        %1699 = vmatpush1.msra.mxu0 0.0
        %1700 = vmatprep.subr.mxu0 0.0
        %1701 = vmatpush1.msra.mxu0 0.0
        %1702 = vmatprep.subr.mxu0 0.0
        %1703 = vmatpush1.msra.mxu0 0.0
        %1704 = vmatprep.subr.mxu0 0.0
        %1705 = vmatpush1.msra.mxu0 0.0
        %1706 = vmatprep.subr.mxu0 0.0
        %1707 = vmatpush1.msra.mxu0 0.0
        %1708 = vmatprep.subr.mxu0 0.0
        %1709 = vmatpush1.msra.mxu0 0.0
        %1710 = vmatprep.mubr.f32.mxu0 0.0
        %1711 = vmatmul.mubr.f32.gmra.mrb[0].mxu0 %v1567
        %v1712 = vpop.f32.mrb[0].mxu0
        %v1713 = vadd.f32 0.0, %v1712
        %v1714 = vpop.f32.mrb[0].mxu0
        %1715 = vdwg.mxu0
        %v1716 = vadd.f32 %v1547, %v1642
        %v1717 = vadd.f32 %v1548, %v1644
        %v1718 = vadd.f32 %v1549, %v1713
        %v1719 = vld [vmem:[%s216] sm:$0xff]
        %1721 = vset.pattern.permute.xlu0 0
        %1722 = vperm.xlu0 %1721, %v1719
        %v1723 = vpop.permute.xlu0 %1722
        %v1725 = vadd.f32 %v1716, %v1723
        %v1726 = vadd.f32 %v1717, %v1723
        %v1727 = vadd.f32 %v1718, %v1723
        %vm1728 = vcmp.gt.f32.partialorder %v1725, 0.0
        %vm1729 = vcmp.gt.f32.partialorder %v1726, 0.0
        %vm1730 = vcmp.gt.f32.partialorder %v1727, 0.0
        %v1731 = vmul.f32 %v1725, 0.01
        %v1732 = vmul.f32 %v1726, 0.01
        %v1733 = vmul.f32 %v1727, 0.01
        %v1734 = vsel %vm1728, %v1725, %v1731
        %v1735 = vsel %vm1729, %v1726, %v1732
        %v1736 = vsel %vm1730, %v1727, %v1733
        %1737 = vst [vmem:[%s203] sm:$0xff] %v1734
        %1738 = vst [vmem:[%s203 + $0x8] sm:$0xff] %v1735
        %vm1739 = vcmask 261120
        %1740 = vst.msk [vmem:[%s203 + $0x10] sm:$0xff] %vm1739, %v1736
        %s1741 = sand.u32 %s117, 1
        %s1742 = scalar_lea.sflag [#allocation3], %s1741
        %s1743 = sand.u32 %s117, 1
        %s1744 = smul.addr %s1743, 24
        %s1745 = scalar_lea.vmem [#allocation2], %s1744
        // Predicated region
        $region33: #{tpu_custom_call.1} parent=31 // pred_check
          %p1746 = pneg %p127
        $region34: #{tpu_custom_call.1} parent=31 // pred_check_branch
          %1748 = sbr.rel (%p1746) target = $region36
        $region35: #{tpu_custom_call.1} parent=31 // pred_region
          %s1750 = ssub.s32 384, 384
          %1751 = vsyncadd %s1742, %s1750
          %s1752 = smul.addr %s22, 3
          %s1753 = smul.addr %s21, 3
          %s1754 = sadd.s32 %s1752, %s1753
          %s1755 = smul.addr %s1754, 128
          %s1756 = scalar_lea.hbm %s3, %s1755
          %s1758 = sshll.u32 %s1745, 4
          %s1759 = int_to_ptr.vmem [resolvable:$true] %s1758
          %1761 = dma.vmem_to_hbm [thread:$0]  %s1759, 384, %s1756, %s1742
        $region36: #{tpu_custom_call.1} parent=31 // pred_fallthru
          _
      $region32: #{tpu_custom_call.1} parent=5 // pred_fallthru
        _
      %p1762 = scmp.le.s32.totalorder 2, %s12
      // Predicated region
      $region37: #{tpu_custom_call.1} parent=5 // pred_check
        %p1763 = pneg %p1762
      $region38: #{tpu_custom_call.1} parent=5 // pred_check_branch
        %1765 = sbr.rel (%p1763) target = $region40
      $region39: #{tpu_custom_call.1} parent=5 // pred_region
        %s1766 = ssub.s32 %s12, 2
        // Predicated region
        $region41: #{tpu_custom_call.1} parent=39 // pred_check
          %p1767 = pneg %p133
        $region42: #{tpu_custom_call.1} parent=39 // pred_check_branch
          %1769 = sbr.rel (%p1767) target = $region44
        $region43: #{tpu_custom_call.1} parent=39 // pred_region
          %s1770 = sand.u32 %s118, 1
          %s1771 = scalar_lea.sflag [#allocation3], %s1770
          %s1772 = sand.u32 %s118, 1
          %s1773 = smul.addr %s1772, 24
          %s1774 = scalar_lea.vmem [#allocation2], %s1773
          %1775 = dma.done %s1771, 384
        $region44: #{tpu_custom_call.1} parent=39 // pred_fallthru
          _
      $region40: #{tpu_custom_call.1} parent=5 // pred_fallthru
        _
    $region6: #{tpu_custom_call.1} parent=1 // loop_footer
      %s16 = sadd.s32 1, %s12
    $region7: #{tpu_custom_call.1} parent=1 // loop_footer_branch
      %11 = sbr.rel target = $region3
    $region8: #{tpu_custom_call.1} parent=1 // loop_exit
      _
    %1776 = vsyncpa [#allocation3], 1
    %s1777 = scalar_lea.sflag [#allocation3], 1
    %1778 = vsyncpa %s1777, 1

</llo_original>
